<compile_context>
chip_gen: v6e
topology: v6e:2x2x1
jax: 0.10.0
libtpu: 0.0.40
codegen_flags: <defaults>
</compile_context>

<pallas_src>
import functools

import jax
import jax.numpy as jnp
from jax.experimental import pallas as pl
from jax.experimental.pallas import tpu as pltpu


def _round_up(x, m):
    return (x + m - 1) // m * m


def _tile_logits_row(h_ref, wcat_ref, bcat_ref, w_ref, bw_ref):
    """Unnormalized attention logits for the current H tile, as a lane-dense [1, TM] row."""
    L = wcat_ref.shape[1] // 2

    # One fused [TM, D] @ [D, 2L] matmul on the MXU, bf16 inputs, f32 accumulation.
    z = jnp.dot(h_ref[...], wcat_ref[...],
                preferred_element_type=jnp.float32) + bcat_ref[...]          # [TM, 2L] f32

    # attention_V (tanh) and attention_U (sigmoid gate) halves, then the gate product.
    # TODO(synk): Dropout(p=0.25) on the V/U branches is identity in eval mode;
    # training-time stateful dropout masks are intentionally omitted.
    gated = jnp.tanh(z[:, :L]) * jax.nn.sigmoid(z[:, L:])                    # [TM, L] f32

    # attention_w (Linear L->1), emitted directly lane-dense:
    # [8, L] . [TM, L]^T -> [8, TM] on the MXU (standard q@k^T contraction); row 0 is the
    # real projection (the other 7 rows are broadcast copies and cost nothing extra).
    head = jax.lax.dot_general(w_ref[...], gated,
                               dimension_numbers=(((1,), (1,)), ((), ())),
                               preferred_element_type=jnp.float32)           # [8, TM]
    return head[0:1, :] + bw_ref[0, 0]                                       # [1, TM]


def _fused_kernel(h_ref, wcat_ref, bcat_ref, w_ref, bw_ref, out_ref, *, valid_m):
    """Per-tile logits + fused global softmax (single launch).

    out_ref is the full [num_tiles, TM] lane-dense logit slab, VMEM-resident across the
    whole serial grid (constant output index_map, "arbitrary" axis); the last grid step
    masks the padded tail to -inf and normalizes the slab in place.
    """
    i = pl.program_id(0)
    out_ref[pl.ds(i, 1), :] = _tile_logits_row(h_ref, wcat_ref, bcat_ref, w_ref, bw_ref)

    @pl.when(i == pl.num_programs(0) - 1)
    def _():
        nt, tm = out_ref.shape
        r = jax.lax.broadcasted_iota(jnp.int32, (nt, tm), 0)
        c = jax.lax.broadcasted_iota(jnp.int32, (nt, tm), 1)
        x = jnp.where(r * tm + c < valid_m, out_ref[...], -jnp.inf)          # mask padding
        m = jnp.max(jnp.max(x, axis=-1, keepdims=True), axis=0, keepdims=True)
        e = jnp.exp(x - m)                                                   # padded -> 0
        s = jnp.sum(jnp.sum(e, axis=-1, keepdims=True), axis=0, keepdims=True)
        # Exact reciprocal keeps the sum-to-1 property within 1e-5.
        out_ref[...] = e * pl.reciprocal(s)


def _logits_kernel(h_ref, wcat_ref, bcat_ref, w_ref, bw_ref, out_ref):
    """Two-pass fallback: lane-dense per-tile logits only (pipelined, parallel grid)."""
    out_ref[...] = _tile_logits_row(h_ref, wcat_ref, bcat_ref, w_ref, bw_ref)


def fuse_attention_params(Wv, bv, Wu, bu, w, bw):
    """One-time parameter fusion; hoist out of the per-call path when weights are static."""
    _, L = Wv.shape
    Wcat = jnp.concatenate([Wv, Wu], axis=1)                                 # [D, 2L]
    bcat = jnp.concatenate([jnp.reshape(bv, (1, L)),
                            jnp.reshape(bu, (1, L))], axis=1).astype(jnp.float32)  # [1, 2L]
    w_rows = jnp.tile(jnp.reshape(w, (1, L)).astype(jnp.float32), (8, 1))    # [8, L]
    bw_s = jnp.reshape(bw, (1, 1)).astype(jnp.float32)                       # [1, 1] -> SMEM
    return Wcat, bcat, w_rows, bw_s


@functools.partial(jax.jit, static_argnames=("block_m",))
def gated_attention_fused(H, Wcat, bcat, w_rows, bw_s, *, block_m=2048):
    """A_norm = softmax(tanh(H Wv + bv) * sigmoid(H Wu + bu) @ w + bw, axis=0)."""
    M, D = H.shape
    twoL = Wcat.shape[1]
    L = twoL // 2

    # M tile: multiple of 256 (bf16 sublane pack + 128-lane alignment of the logit row),
    # as large as block_m; bytes/step stay small so pipeline overhead is amortized.
    TM = max(256, min(_round_up(block_m, 256), _round_up(M, 256)))
    Mp = _round_up(M, TM)
    num_tiles = Mp // TM
    Hp = H if Mp == M else jnp.pad(H, ((0, Mp - M), (0, 0)))

    # Fused single-launch path whenever the full logit slab comfortably sits in VMEM.
    use_fused = Mp <= (1 << 18)

    itemsize = jnp.dtype(H.dtype).itemsize
    param_bytes = D * twoL * jnp.dtype(Wcat.dtype).itemsize + (twoL + 8 * L + 1) * 4
    out_bytes = (num_tiles * TM * 4) if use_fused else (2 * TM * 4)
    need = 2 * TM * D * itemsize + out_bytes + param_bytes
    # Stay well under v7x's 64 MiB physical VMEM (scoped default there is 32 MiB).
    vmem_limit = int(min(max(4 * need, 16 * 1024 * 1024), 40 * 1024 * 1024))

    in_specs = [
        pl.BlockSpec((TM, D), lambda i: (i, 0)),             # H tile, pipelined
        pl.BlockSpec((D, twoL), lambda i: (0, 0)),           # fused Wv|Wu, VMEM-resident
        pl.BlockSpec((1, twoL), lambda i: (0, 0)),           # fused bv|bu, VMEM-resident
        pl.BlockSpec((8, L), lambda i: (0, 0)),              # w head rows, VMEM-resident
        pl.BlockSpec(memory_space=pltpu.MemorySpace.SMEM),   # bw scalar
    ]

    if use_fused:
        out = pl.pallas_call(
            functools.partial(_fused_kernel, valid_m=M),
            out_shape=jax.ShapeDtypeStruct((num_tiles, TM), jnp.float32),
            grid=(num_tiles,),
            in_specs=in_specs,
            out_specs=pl.BlockSpec((num_tiles, TM), lambda i: (0, 0)),
            compiler_params=pltpu.CompilerParams(
                dimension_semantics=("arbitrary",),          # softmax is a cross-tile dep
                vmem_limit_bytes=vmem_limit,
            ),
        )(Hp, Wcat, bcat, w_rows, bw_s)
        # Padded positions were masked to -inf inside the kernel (=> exactly 0 here).
        return out.reshape(-1)[:M].reshape(M, 1)

    # Two-pass fallback (very large bags): lane-dense pipelined logits, "parallel" grid
    # (shards across both v7x TensorCores), then a tiny XLA softmax fused with the slice.
    logits = pl.pallas_call(
        _logits_kernel,
        out_shape=jax.ShapeDtypeStruct((1, Mp), jnp.float32),
        grid=(num_tiles,),
        in_specs=in_specs,
        out_specs=pl.BlockSpec((1, TM), lambda i: (0, i)),
        compiler_params=pltpu.CompilerParams(
            dimension_semantics=("parallel",),
            vmem_limit_bytes=vmem_limit,
        ),
    )(Hp, Wcat, bcat, w_rows, bw_s)
    return jax.nn.softmax(logits[0, :M]).reshape(M, 1)


def gated_attention(H, Wv, bv, Wu, bu, w, bw, *, block_m=2048):
    """Convenience entry point that fuses the parameters on every call."""
    return gated_attention_fused(H, *fuse_attention_params(Wv, bv, Wu, bu, w, bw),
                                 block_m=block_m)


if __name__ == "__main__":
    D, L, M = 64, 64, 300   # feature dim, hidden dim, #instances in the bag

    key = jax.random.PRNGKey(0)
    k = jax.random.split(key, 7)

    # Deterministic init mimicking nn.Linear's U(-1/sqrt(fan_in), 1/sqrt(fan_in)).
    bd = 1.0 / float(jnp.sqrt(jnp.float32(D)))
    bl = 1.0 / float(jnp.sqrt(jnp.float32(L)))

    # bf16 activations / projection weights (MXU-native, halves HBM->VMEM traffic);
    # biases and the small L->1 head stay f32.
    H  = jax.random.normal(k[0], (M, D), jnp.float32).astype(jnp.bfloat16)
    Wv = jax.random.uniform(k[1], (D, L), jnp.float32, -bd, bd).astype(jnp.bfloat16)
    bv = jax.random.uniform(k[2], (1, L), jnp.float32, -bd, bd)
    Wu = jax.random.uniform(k[3], (D, L), jnp.float32, -bd, bd).astype(jnp.bfloat16)
    bu = jax.random.uniform(k[4], (1, L), jnp.float32, -bd, bd)
    w  = jax.random.uniform(k[5], (L, 1), jnp.float32, -bl, bl)
    bw = jax.random.uniform(k[6], (1, 1), jnp.float32, -bl, bl)

    # Hoisted one-time weight fusion, then the single fused-launch kernel.
    fused_params = fuse_attention_params(Wv, bv, Wu, bu, w, bw)
    out = gated_attention_fused(H, *fused_params, block_m=2048)
    out = jax.block_until_ready(out)

    # Pure-JAX reference in f32 from the same (bf16-quantized) values.
    Hf, Wvf, Wuf = H.astype(jnp.float32), Wv.astype(jnp.float32), Wu.astype(jnp.float32)
    ref = jax.nn.softmax(
        (jnp.tanh(Hf @ Wvf + bv) * jax.nn.sigmoid(Hf @ Wuf + bu)) @ w + bw, axis=0)

    assert out.shape == (M, 1)
    assert jnp.allclose(jnp.sum(out), 1.0, atol=1e-5)
    assert jnp.allclose(out, ref, atol=3e-5), "Pallas kernel mismatch vs reference"

    print("KERNEL_OK")
</pallas_src>

<mosaic_0001>
module attributes {stable_mosaic.version = 11 : i64} {
  func.func @_fused_kernel(%arg0: i32, %arg1: memref<512x64xbf16, #tpu.memory_space<vmem>>, %arg2: memref<64x128xbf16, #tpu.memory_space<vmem>>, %arg3: memref<1x128xf32, #tpu.memory_space<vmem>>, %arg4: memref<8x64xf32, #tpu.memory_space<vmem>>, %arg5: memref<1x1xf32, #tpu.memory_space<smem>>, %arg6: memref<1x512xf32, #tpu.memory_space<vmem>>) attributes {dimension_semantics = [#tpu.dimension_semantics<arbitrary>], iteration_bounds = array<i64: 1>, scalar_prefetch = 0 : i64, scratch_operands = 0 : i64, tpu.core_type = #tpu.core_type<tc>, window_params = [{transform_indices = @transform_0, window_bounds = array<i64: 512, 64>}, {pipeline_mode = #tpu.pipeline_mode<synchronous>, transform_indices = @transform_1, window_bounds = array<i64: 64, 128>}, {pipeline_mode = #tpu.pipeline_mode<synchronous>, transform_indices = @transform_2, window_bounds = array<i64: 1, 128>}, {pipeline_mode = #tpu.pipeline_mode<synchronous>, transform_indices = @transform_3, window_bounds = array<i64: 8, 64>}, {transform_indices = @transform_4, window_bounds = array<i64: 1, 1>}, {pipeline_mode = #tpu.pipeline_mode<synchronous>, transform_indices = @transform_5, window_bounds = array<i64: 1, 512>}]} {
    %c0 = arith.constant 0 : index
    %c0_0 = arith.constant 0 : index
    %0 = vector.load %arg1[%c0, %c0_0] : memref<512x64xbf16, #tpu.memory_space<vmem>>, vector<512x64xbf16>
    %c0_1 = arith.constant 0 : index
    %c0_2 = arith.constant 0 : index
    %1 = vector.load %arg2[%c0_1, %c0_2] : memref<64x128xbf16, #tpu.memory_space<vmem>>, vector<64x128xbf16>
    %cst = arith.constant dense<0.000000e+00> : vector<512x128xf32>
    %2 = tpu.matmul %0, %1, %cst {dimension_numbers = #tpu.dot_dimension_numbers<[1], [0], [0], [1], [0, 0, 1, 1], [], []>} : vector<512x64xbf16>, vector<64x128xbf16>, vector<512x128xf32> -> vector<512x128xf32>
    %c0_3 = arith.constant 0 : index
    %c0_4 = arith.constant 0 : index
    %3 = vector.load %arg3[%c0_3, %c0_4] : memref<1x128xf32, #tpu.memory_space<vmem>>, vector<1x128xf32>
    %4 = vector.broadcast %3 : vector<1x128xf32> to vector<512x128xf32>
    %5 = arith.addf %2, %4 : vector<512x128xf32>
    %6 = vector.extract_strided_slice %5 {offsets = [0, 0], sizes = [512, 64], strides = [1, 1]} : vector<512x128xf32> to vector<512x64xf32>
    %7 = math.tanh %6 : vector<512x64xf32>
    %8 = vector.extract_strided_slice %5 {offsets = [0, 64], sizes = [512, 64], strides = [1, 1]} : vector<512x128xf32> to vector<512x64xf32>
    %9 = arith.negf %8 : vector<512x64xf32>
    %10 = math.exp %9 : vector<512x64xf32>
    %cst_5 = arith.constant 1.000000e+00 : f32
    %11 = vector.broadcast %cst_5 : f32 to vector<512x64xf32>
    %12 = arith.addf %11, %10 : vector<512x64xf32>
    %13 = arith.divf %11, %12 : vector<512x64xf32>
    %14 = arith.mulf %7, %13 : vector<512x64xf32>
    %c0_6 = arith.constant 0 : index
    %c0_7 = arith.constant 0 : index
    %15 = vector.load %arg4[%c0_6, %c0_7] : memref<8x64xf32, #tpu.memory_space<vmem>>, vector<8x64xf32>
    %cst_8 = arith.constant dense<0.000000e+00> : vector<8x512xf32>
    %16 = tpu.matmul %15, %14, %cst_8 {dimension_numbers = #tpu.dot_dimension_numbers<[1], [1], [0], [0], [0, 0, 1, 0], [], []>} : vector<8x64xf32>, vector<512x64xf32>, vector<8x512xf32> -> vector<8x512xf32>
    %17 = vector.extract_strided_slice %16 {offsets = [0, 0], sizes = [1, 512], strides = [1, 1]} : vector<8x512xf32> to vector<1x512xf32>
    %c0_9 = arith.constant 0 : index
    %c0_10 = arith.constant 0 : index
    %18 = memref.load %arg5[%c0_9, %c0_10] : memref<1x1xf32, #tpu.memory_space<smem>>
    %19 = vector.broadcast %18 : f32 to vector<1x512xf32>
    %20 = arith.addf %17, %19 : vector<1x512xf32>
    %21 = arith.index_cast %arg0 : i32 to index
    %c0_11 = arith.constant 0 : index
    %22 = vector.load %arg6[%21, %c0_11] : memref<1x512xf32, #tpu.memory_space<vmem>>, vector<1x512xf32>
    tpu.vector_store %arg6[%21, %c0_11], %20 {strides = array<i32>} : memref<1x512xf32, #tpu.memory_space<vmem>>, vector<1x512xf32>,
    %c0_i32 = arith.constant 0 : i32
    %23 = arith.cmpi eq, %arg0, %c0_i32 : i32
    %24 = arith.extui %23 : i1 to i32
    %c0_i32_12 = arith.constant 0 : i32
    %25 = arith.cmpi ne, %24, %c0_i32_12 : i32
    scf.if %25 {
      %26 = tpu.iota {dimensions = array<i32: 0>} : vector<1x512xi32>
      %27 = tpu.iota {dimensions = array<i32: 1>} : vector<1x512xi32>
      %c512_i32 = arith.constant 512 : i32
      %28 = vector.broadcast %c512_i32 : i32 to vector<1x512xi32>
      %29 = arith.muli %26, %28 : vector<1x512xi32>
      %30 = arith.addi %29, %27 : vector<1x512xi32>
      %c300_i32 = arith.constant 300 : i32
      %31 = vector.broadcast %c300_i32 : i32 to vector<1x512xi32>
      %32 = arith.cmpi slt, %30, %31 : vector<1x512xi32>
      %c0_13 = arith.constant 0 : index
      %c0_14 = arith.constant 0 : index
      %33 = vector.load %arg6[%c0_13, %c0_14] : memref<1x512xf32, #tpu.memory_space<vmem>>, vector<1x512xf32>
      %cst_15 = arith.constant 0xFF800000 : f32
      %34 = vector.broadcast %cst_15 : f32 to vector<1x512xf32>
      %35 = arith.select %32, %33, %34 : vector<1x512xi1>, vector<1x512xf32>
      %cst_16 = arith.constant dense<0xFF800000> : vector<1xf32>
      %36 = vector.multi_reduction <maximumf>, %35, %cst_16 [1] : vector<1x512xf32> to vector<1xf32>
      %37 = vector.shape_cast %36 : vector<1xf32> to vector<1x1xf32>
      %cst_17 = arith.constant dense<0xFF800000> : vector<1xf32>
      %38 = vector.multi_reduction <maximumf>, %37, %cst_17 [0] : vector<1x1xf32> to vector<1xf32>
      %39 = vector.shape_cast %38 : vector<1xf32> to vector<1x1xf32>
      %40 = vector.broadcast %39 : vector<1x1xf32> to vector<1x512xf32>
      %41 = arith.subf %35, %40 : vector<1x512xf32>
      %42 = math.exp %41 : vector<1x512xf32>
      %cst_18 = arith.constant dense<0.000000e+00> : vector<1xf32>
      %43 = vector.multi_reduction <add>, %42, %cst_18 [1] : vector<1x512xf32> to vector<1xf32>
      %44 = vector.shape_cast %43 : vector<1xf32> to vector<1x1xf32>
      %cst_19 = arith.constant dense<0.000000e+00> : vector<1xf32>
      %45 = vector.multi_reduction <add>, %44, %cst_19 [0] : vector<1x1xf32> to vector<1xf32>
      %46 = vector.shape_cast %45 : vector<1xf32> to vector<1x1xf32>
      %47 = tpu.reciprocal %46 : vector<1x1xf32> -> vector<1x1xf32>
      %48 = vector.broadcast %47 : vector<1x1xf32> to vector<1x512xf32>
      %49 = arith.mulf %42, %48 : vector<1x512xf32>
      %c0_20 = arith.constant 0 : index
      %c0_21 = arith.constant 0 : index
      %50 = vector.load %arg6[%c0_20, %c0_21] : memref<1x512xf32, #tpu.memory_space<vmem>>, vector<1x512xf32>
      tpu.vector_store %arg6[%c0_20, %c0_21], %49 {strides = array<i32>} : memref<1x512xf32, #tpu.memory_space<vmem>>, vector<1x512xf32>,
    } else {
    }
    return
  }
  func.func @transform_0(%arg0: i32) -> (i32, i32) {
    %c0_i32 = arith.constant 0 : i32
    %c0_i32_0 = arith.constant 0 : i32
    return %arg0, %c0_i32 : i32, i32
  }
  func.func @transform_1(%arg0: i32) -> (i32, i32) {
    %c0_i32 = arith.constant 0 : i32
    %c0_i32_0 = arith.constant 0 : i32
    %c0_i32_1 = arith.constant 0 : i32
    return %c0_i32, %c0_i32_0 : i32, i32
  }
  func.func @transform_2(%arg0: i32) -> (i32, i32) {
    %c0_i32 = arith.constant 0 : i32
    %c0_i32_0 = arith.constant 0 : i32
    %c0_i32_1 = arith.constant 0 : i32
    return %c0_i32, %c0_i32_0 : i32, i32
  }
  func.func @transform_3(%arg0: i32) -> (i32, i32) {
    %c0_i32 = arith.constant 0 : i32
    %c0_i32_0 = arith.constant 0 : i32
    %c0_i32_1 = arith.constant 0 : i32
    return %c0_i32, %c0_i32_0 : i32, i32
  }
  func.func @transform_4(%arg0: i32) -> (i32, i32) {
    %c0_i32 = arith.constant 0 : i32
    %c0_i32_0 = arith.constant 0 : i32
    %c0_i32_1 = arith.constant 0 : i32
    return %c0_i32, %c0_i32_0 : i32, i32
  }
  func.func @transform_5(%arg0: i32) -> (i32, i32) {
    %c0_i32 = arith.constant 0 : i32
    %c0_i32_0 = arith.constant 0 : i32
    %c0_i32_1 = arith.constant 0 : i32
    return %c0_i32, %c0_i32_0 : i32, i32
  }
}

</mosaic_0001>

<llo_original>
// kernel: gated_attention_fused.1
$region0: #{gated_attention_fused.1}
  #allocation0 [shape = 'u32[]', space=smem, size = 0x4, offset = 0x4, fixed_abs, tag = 'smem constant byte address 0x4 - core index']
  #allocation1 [shape = 'u32[144,128]{1,0:T(1,128)}', space=vmem, size = 0x12000, scoped, tag = 'internal scratch']
  #allocation2 [shape = 'f32[1,1]{1,0:T(1,128)S(6)}', space=smem, size = 0x200, scoped, tag = 'scoped memory for gated_attention_fused.1']
  %s0 = inlined_call_operand.vmem [shape: bf16[512,64], index: 0, kind: input, shape index: {}]
  %s1 = inlined_call_operand.vmem [shape: bf16[64,128], index: 1, kind: input, shape index: {}]
  %s2 = inlined_call_operand.vmem [shape: f32[1,128], index: 2, kind: input, shape index: {}]
  %s3 = inlined_call_operand.vmem [shape: f32[8,64], index: 3, kind: input, shape index: {}]
  %s4 = inlined_call_operand.<no memory space> [shape: f32[1,1], index: 4, kind: input, shape index: {}]
  %s5 = inlined_call_operand.vmem [shape: f32[1,512], index: 5, kind: output, shape index: {}]
  %s6 = sld [smem:[#allocation0]]
  $region34: #{gated_attention_fused.1} parent=0
    _
  %s8 = ssub.s32 1, %s6
  %s9 = scalar_select 0, %s8, %s6
  %10 = sst [smem:[#allocation2]] %s4
  // Predicated region
  $region2: #{gated_attention_fused.1} parent=0 // pred_check
    _
  $region3: #{gated_attention_fused.1} parent=0 // pred_check_branch
    %12 = sbr.rel (0) target = $region5
  $region4: #{gated_attention_fused.1} parent=0 // pred_region
    _
  $region5: #{gated_attention_fused.1} parent=0 // pred_fallthru
    _
  // Predicated region
  $region6: #{gated_attention_fused.1} parent=0 // pred_check
    _
  $region7: #{gated_attention_fused.1} parent=0 // pred_check_branch
    %14 = sbr.rel (0) target = $region9
  $region8: #{gated_attention_fused.1} parent=0 // pred_region
    _
  $region9: #{gated_attention_fused.1} parent=0 // pred_fallthru
    _
  // Predicated region
  $region10: #{gated_attention_fused.1} parent=0 // pred_check
    _
  $region11: #{gated_attention_fused.1} parent=0 // pred_check_branch
    %16 = sbr.rel (0) target = $region13
  $region12: #{gated_attention_fused.1} parent=0 // pred_region
    _
  $region13: #{gated_attention_fused.1} parent=0 // pred_fallthru
    _
  // Predicated region
  $region14: #{gated_attention_fused.1} parent=0 // pred_check
    _
  $region15: #{gated_attention_fused.1} parent=0 // pred_check_branch
    %18 = sbr.rel (0) target = $region17
  $region16: #{gated_attention_fused.1} parent=0 // pred_region
    _
  $region17: #{gated_attention_fused.1} parent=0 // pred_fallthru
    _
  // Predicated region
  $region18: #{gated_attention_fused.1} parent=0 // pred_check
    _
  $region19: #{gated_attention_fused.1} parent=0 // pred_check_branch
    %20 = sbr.rel (0) target = $region21
  $region20: #{gated_attention_fused.1} parent=0 // pred_region
    _
  $region21: #{gated_attention_fused.1} parent=0 // pred_fallthru
    _
  %v22 = vld [vmem:[%s0] sm:$0xf]
  %v23 = vld [vmem:[%s0 + $0x4] sm:$0xf]
  %v24 = vld [vmem:[%s0 + $0x8] sm:$0xf]
  %v25 = vld [vmem:[%s0 + $0xc] sm:$0xf]
  %v26 = vld [vmem:[%s0 + $0x10] sm:$0xf]
  %v27 = vld [vmem:[%s0 + $0x14] sm:$0xf]
  %v28 = vld [vmem:[%s0 + $0x18] sm:$0xf]
  %v29 = vld [vmem:[%s0 + $0x1c] sm:$0xf]
  %v30 = vld [vmem:[%s0 + $0x20] sm:$0xf]
  %v31 = vld [vmem:[%s0 + $0x24] sm:$0xf]
  %v32 = vld [vmem:[%s0 + $0x28] sm:$0xf]
  %v33 = vld [vmem:[%s0 + $0x2c] sm:$0xf]
  %v34 = vld [vmem:[%s0 + $0x30] sm:$0xf]
  %v35 = vld [vmem:[%s0 + $0x34] sm:$0xf]
  %v36 = vld [vmem:[%s0 + $0x38] sm:$0xf]
  %v37 = vld [vmem:[%s0 + $0x3c] sm:$0xf]
  %v38 = vld [vmem:[%s0 + $0x40] sm:$0xf]
  %v39 = vld [vmem:[%s0 + $0x44] sm:$0xf]
  %v40 = vld [vmem:[%s0 + $0x48] sm:$0xf]
  %v41 = vld [vmem:[%s0 + $0x4c] sm:$0xf]
  %v42 = vld [vmem:[%s0 + $0x50] sm:$0xf]
  %v43 = vld [vmem:[%s0 + $0x54] sm:$0xf]
  %v44 = vld [vmem:[%s0 + $0x58] sm:$0xf]
  %v45 = vld [vmem:[%s0 + $0x5c] sm:$0xf]
  %v46 = vld [vmem:[%s0 + $0x60] sm:$0xf]
  %v47 = vld [vmem:[%s0 + $0x64] sm:$0xf]
  %v48 = vld [vmem:[%s0 + $0x68] sm:$0xf]
  %v49 = vld [vmem:[%s0 + $0x6c] sm:$0xf]
  %v50 = vld [vmem:[%s0 + $0x70] sm:$0xf]
  %v51 = vld [vmem:[%s0 + $0x74] sm:$0xf]
  %v52 = vld [vmem:[%s0 + $0x78] sm:$0xf]
  %v53 = vld [vmem:[%s0 + $0x7c] sm:$0xf]
  %v54 = vld [vmem:[%s0 + $0x80] sm:$0xf]
  %v55 = vld [vmem:[%s0 + $0x84] sm:$0xf]
  %v56 = vld [vmem:[%s0 + $0x88] sm:$0xf]
  %v57 = vld [vmem:[%s0 + $0x8c] sm:$0xf]
  %v58 = vld [vmem:[%s0 + $0x90] sm:$0xf]
  %v59 = vld [vmem:[%s0 + $0x94] sm:$0xf]
  %v60 = vld [vmem:[%s0 + $0x98] sm:$0xf]
  %v61 = vld [vmem:[%s0 + $0x9c] sm:$0xf]
  %v62 = vld [vmem:[%s0 + $0xa0] sm:$0xf]
  %v63 = vld [vmem:[%s0 + $0xa4] sm:$0xf]
  %v64 = vld [vmem:[%s0 + $0xa8] sm:$0xf]
  %v65 = vld [vmem:[%s0 + $0xac] sm:$0xf]
  %v66 = vld [vmem:[%s0 + $0xb0] sm:$0xf]
  %v67 = vld [vmem:[%s0 + $0xb4] sm:$0xf]
  %v68 = vld [vmem:[%s0 + $0xb8] sm:$0xf]
  %v69 = vld [vmem:[%s0 + $0xbc] sm:$0xf]
  %v70 = vld [vmem:[%s0 + $0xc0] sm:$0xf]
  %v71 = vld [vmem:[%s0 + $0xc4] sm:$0xf]
  %v72 = vld [vmem:[%s0 + $0xc8] sm:$0xf]
  %v73 = vld [vmem:[%s0 + $0xcc] sm:$0xf]
  %v74 = vld [vmem:[%s0 + $0xd0] sm:$0xf]
  %v75 = vld [vmem:[%s0 + $0xd4] sm:$0xf]
  %v76 = vld [vmem:[%s0 + $0xd8] sm:$0xf]
  %v77 = vld [vmem:[%s0 + $0xdc] sm:$0xf]
  %v78 = vld [vmem:[%s0 + $0xe0] sm:$0xf]
  %v79 = vld [vmem:[%s0 + $0xe4] sm:$0xf]
  %v80 = vld [vmem:[%s0 + $0xe8] sm:$0xf]
  %v81 = vld [vmem:[%s0 + $0xec] sm:$0xf]
  %v82 = vld [vmem:[%s0 + $0xf0] sm:$0xf]
  %v83 = vld [vmem:[%s0 + $0xf4] sm:$0xf]
  %v84 = vld [vmem:[%s0 + $0xf8] sm:$0xf]
  %v85 = vld [vmem:[%s0 + $0xfc] sm:$0xf]
  %v86 = vld [vmem:[%s1] sm:$0xf]
  %v87 = vld [vmem:[%s1 + $0x4] sm:$0xf]
  %v88 = vld [vmem:[%s1 + $0x8] sm:$0xf]
  %v89 = vld [vmem:[%s1 + $0xc] sm:$0xf]
  %v90 = vld [vmem:[%s1 + $0x10] sm:$0xf]
  %v91 = vld [vmem:[%s1 + $0x14] sm:$0xf]
  %v92 = vld [vmem:[%s1 + $0x18] sm:$0xf]
  %v93 = vld [vmem:[%s1 + $0x1c] sm:$0xf]
  %v94 = vld [vmem:[%s2] sm:$0x1]
  %v96 = vlaneseq
  %v97 = vshrl.u32 %v96, 7
  %v98 = vsub.s32 0, %v97
  %v99 = vrot.slane %v94, %v98
  %v165 = vunpack.c.l.b16 %v22
  %v166 = vunpack.c.l.b16 %v23
  %v167 = vunpack.c.l.b16 %v24
  %v168 = vunpack.c.l.b16 %v25
  %v169 = vunpack.c.l.b16 %v26
  %v170 = vunpack.c.l.b16 %v27
  %v171 = vunpack.c.l.b16 %v28
  %v172 = vunpack.c.l.b16 %v29
  %v173 = vunpack.c.l.b16 %v30
  %v174 = vunpack.c.l.b16 %v31
  %v175 = vunpack.c.l.b16 %v32
  %v176 = vunpack.c.l.b16 %v33
  %v177 = vunpack.c.l.b16 %v34
  %v178 = vunpack.c.l.b16 %v35
  %v179 = vunpack.c.l.b16 %v36
  %v180 = vunpack.c.l.b16 %v37
  %v181 = vunpack.c.l.b16 %v38
  %v182 = vunpack.c.l.b16 %v39
  %v183 = vunpack.c.l.b16 %v40
  %v184 = vunpack.c.l.b16 %v41
  %v185 = vunpack.c.l.b16 %v42
  %v186 = vunpack.c.l.b16 %v43
  %v187 = vunpack.c.l.b16 %v44
  %v188 = vunpack.c.l.b16 %v45
  %v189 = vunpack.c.l.b16 %v46
  %v190 = vunpack.c.l.b16 %v47
  %v191 = vunpack.c.l.b16 %v48
  %v192 = vunpack.c.l.b16 %v49
  %v193 = vunpack.c.l.b16 %v50
  %v194 = vunpack.c.l.b16 %v51
  %v195 = vunpack.c.l.b16 %v52
  %v196 = vunpack.c.l.b16 %v53
  %v197 = vunpack.c.l.b16 %v54
  %v198 = vunpack.c.l.b16 %v55
  %v199 = vunpack.c.l.b16 %v56
  %v200 = vunpack.c.l.b16 %v57
  %v201 = vunpack.c.l.b16 %v58
  %v202 = vunpack.c.l.b16 %v59
  %v203 = vunpack.c.l.b16 %v60
  %v204 = vunpack.c.l.b16 %v61
  %v205 = vunpack.c.l.b16 %v62
  %v206 = vunpack.c.l.b16 %v63
  %v207 = vunpack.c.l.b16 %v64
  %v208 = vunpack.c.l.b16 %v65
  %v209 = vunpack.c.l.b16 %v66
  %v210 = vunpack.c.l.b16 %v67
  %v211 = vunpack.c.l.b16 %v68
  %v212 = vunpack.c.l.b16 %v69
  %v213 = vunpack.c.l.b16 %v70
  %v214 = vunpack.c.l.b16 %v71
  %v215 = vunpack.c.l.b16 %v72
  %v216 = vunpack.c.l.b16 %v73
  %v217 = vunpack.c.l.b16 %v74
  %v218 = vunpack.c.l.b16 %v75
  %v219 = vunpack.c.l.b16 %v76
  %v220 = vunpack.c.l.b16 %v77
  %v221 = vunpack.c.l.b16 %v78
  %v222 = vunpack.c.l.b16 %v79
  %v223 = vunpack.c.l.b16 %v80
  %v224 = vunpack.c.l.b16 %v81
  %v225 = vunpack.c.l.b16 %v82
  %v226 = vunpack.c.l.b16 %v83
  %v227 = vunpack.c.l.b16 %v84
  %v228 = vunpack.c.l.b16 %v85
  %v229 = vpack.c.b16 %v166, %v165
  %v230 = vpack.c.b16 %v168, %v167
  %v231 = vpack.c.b16 %v170, %v169
  %v232 = vpack.c.b16 %v172, %v171
  %v233 = vpack.c.b16 %v174, %v173
  %v234 = vpack.c.b16 %v176, %v175
  %v235 = vpack.c.b16 %v178, %v177
  %v236 = vpack.c.b16 %v180, %v179
  %v237 = vpack.c.b16 %v182, %v181
  %v238 = vpack.c.b16 %v184, %v183
  %v239 = vpack.c.b16 %v186, %v185
  %v240 = vpack.c.b16 %v188, %v187
  %v241 = vpack.c.b16 %v190, %v189
  %v242 = vpack.c.b16 %v192, %v191
  %v243 = vpack.c.b16 %v194, %v193
  %v244 = vpack.c.b16 %v196, %v195
  %v245 = vpack.c.b16 %v198, %v197
  %v246 = vpack.c.b16 %v200, %v199
  %v247 = vpack.c.b16 %v202, %v201
  %v248 = vpack.c.b16 %v204, %v203
  %v249 = vpack.c.b16 %v206, %v205
  %v250 = vpack.c.b16 %v208, %v207
  %v251 = vpack.c.b16 %v210, %v209
  %v252 = vpack.c.b16 %v212, %v211
  %v253 = vpack.c.b16 %v214, %v213
  %v254 = vpack.c.b16 %v216, %v215
  %v255 = vpack.c.b16 %v218, %v217
  %v256 = vpack.c.b16 %v220, %v219
  %v257 = vpack.c.b16 %v222, %v221
  %v258 = vpack.c.b16 %v224, %v223
  %v259 = vpack.c.b16 %v226, %v225
  %v260 = vpack.c.b16 %v228, %v227
  %v269 = vunpack.c.l.b16 %v86
  %v270 = vunpack.c.l.b16 %v87
  %v271 = vunpack.c.l.b16 %v88
  %v272 = vunpack.c.l.b16 %v89
  %v273 = vunpack.c.l.b16 %v90
  %v274 = vunpack.c.l.b16 %v91
  %v275 = vunpack.c.l.b16 %v92
  %v276 = vunpack.c.l.b16 %v93
  %v277 = vpack.c.b16 %v270, %v269
  %v278 = vpack.c.b16 %v272, %v271
  %v279 = vpack.c.b16 %v274, %v273
  %v280 = vpack.c.b16 %v276, %v275
  %vm285 = vcmask 523264
  %v287 = vsel %vm285, %v229, 0
  %v290 = vsel %vm285, %v230, 0
  %v293 = vsel %vm285, %v231, 0
  %v296 = vsel %vm285, %v232, 0
  %v299 = vsel %vm285, %v233, 0
  %v302 = vsel %vm285, %v234, 0
  %v305 = vsel %vm285, %v235, 0
  %v308 = vsel %vm285, %v236, 0
  %v311 = vsel %vm285, %v237, 0
  %v314 = vsel %vm285, %v238, 0
  %v317 = vsel %vm285, %v239, 0
  %v320 = vsel %vm285, %v240, 0
  %v323 = vsel %vm285, %v241, 0
  %v326 = vsel %vm285, %v242, 0
  %v329 = vsel %vm285, %v243, 0
  %v332 = vsel %vm285, %v244, 0
  %v335 = vsel %vm285, %v245, 0
  %v338 = vsel %vm285, %v246, 0
  %v341 = vsel %vm285, %v247, 0
  %v344 = vsel %vm285, %v248, 0
  %v347 = vsel %vm285, %v249, 0
  %v350 = vsel %vm285, %v250, 0
  %v353 = vsel %vm285, %v251, 0
  %v356 = vsel %vm285, %v252, 0
  %v359 = vsel %vm285, %v253, 0
  %v362 = vsel %vm285, %v254, 0
  %v365 = vsel %vm285, %v255, 0
  %v368 = vsel %vm285, %v256, 0
  %v371 = vsel %vm285, %v257, 0
  %v374 = vsel %vm285, %v258, 0
  %v377 = vsel %vm285, %v259, 0
  %v380 = vsel %vm285, %v260, 0
  %382 = vmatprep.subr.bf16.mxu0 0
  %383 = vmatpush1.bf16.msra.mxu0 0
  %384 = vmatprep.subr.bf16.mxu0 0
  %385 = vmatpush1.bf16.msra.mxu0 0
  %386 = vmatprep.subr.bf16.mxu0 0
  %387 = vmatpush1.bf16.msra.mxu0 0
  %388 = vmatprep.subr.bf16.mxu0 0
  %389 = vmatpush1.bf16.msra.mxu0 0
  %390 = vmatprep.subr.bf16.mxu0 0
  %391 = vmatpush1.bf16.msra.mxu0 %v280
  %392 = vmatprep.subr.bf16.mxu0 0
  %393 = vmatpush1.bf16.msra.mxu0 %v279
  %394 = vmatprep.subr.bf16.mxu0 0
  %395 = vmatpush1.bf16.msra.mxu0 %v278
  %396 = vmatprep.subr.bf16.mxu0 0
  %397 = vmatpush1.bf16.msra.mxu0 %v277
  %398 = vmatprep.subr.bf16.mxu0 0
  %399 = vmatpush2.bf16.msra.mxu0 0
  %400 = vmatprep.subr.bf16.mxu0 0
  %401 = vmatpush2.bf16.msra.mxu0 0
  %402 = vmatprep.subr.bf16.mxu0 0
  %403 = vmatpush2.bf16.msra.mxu0 0
  %404 = vmatprep.subr.bf16.mxu0 0
  %405 = vmatpush2.bf16.msra.mxu0 0
  %406 = vmatprep.subr.bf16.mxu0 0
  %407 = vmatpush2.bf16.msra.mxu0 0
  %408 = vmatprep.subr.bf16.mxu0 0
  %409 = vmatpush2.bf16.msra.mxu0 0
  %410 = vmatprep.subr.bf16.mxu0 0
  %411 = vmatpush2.bf16.msra.mxu0 0
  %412 = vmatprep.subr.bf16.mxu0 0
  %413 = vmatpush2.bf16.msra.mxu0 0
  %414 = vmatprep.mubr.bf16.mxu0 0
  %415 = vmatmul.mubr.bf16.gmra.mxu0 %v287
  %v416 = vpop.f32.mrf.mxu0
  %v417 = vadd.f32 %v99, %v416
  %v418 = vpop.f32.mrf.mxu0
  %v419 = vpop.f32.mrf.mxu0
  %v420 = vadd.f32 %v99, %v419
  %v421 = vpop.f32.mrf.mxu0
  %422 = vmatprep.mubr.bf16.mxu0 0
  %423 = vmatmul.mubr.bf16.gmra.mxu0 %v290
  %v424 = vpop.f32.mrf.mxu0
  %v425 = vadd.f32 %v99, %v424
  %v426 = vpop.f32.mrf.mxu0
  %v427 = vpop.f32.mrf.mxu0
  %v428 = vadd.f32 %v99, %v427
  %v429 = vpop.f32.mrf.mxu0
  %430 = vmatprep.mubr.bf16.mxu0 0
  %431 = vmatmul.mubr.bf16.gmra.mxu0 %v293
  %v432 = vpop.f32.mrf.mxu0
  %v433 = vadd.f32 %v99, %v432
  %v434 = vpop.f32.mrf.mxu0
  %v435 = vpop.f32.mrf.mxu0
  %v436 = vadd.f32 %v99, %v435
  %v437 = vpop.f32.mrf.mxu0
  %438 = vmatprep.mubr.bf16.mxu0 0
  %439 = vmatmul.mubr.bf16.gmra.mxu0 %v296
  %v440 = vpop.f32.mrf.mxu0
  %v441 = vadd.f32 %v99, %v440
  %v442 = vpop.f32.mrf.mxu0
  %v443 = vpop.f32.mrf.mxu0
  %v444 = vadd.f32 %v99, %v443
  %v445 = vpop.f32.mrf.mxu0
  %446 = vmatprep.mubr.bf16.mxu0 0
  %447 = vmatmul.mubr.bf16.gmra.mxu0 %v299
  %v448 = vpop.f32.mrf.mxu0
  %v449 = vadd.f32 %v99, %v448
  %v450 = vpop.f32.mrf.mxu0
  %v451 = vpop.f32.mrf.mxu0
  %v452 = vadd.f32 %v99, %v451
  %v453 = vpop.f32.mrf.mxu0
  %454 = vmatprep.mubr.bf16.mxu0 0
  %455 = vmatmul.mubr.bf16.gmra.mxu0 %v302
  %v456 = vpop.f32.mrf.mxu0
  %v457 = vadd.f32 %v99, %v456
  %v458 = vpop.f32.mrf.mxu0
  %v459 = vpop.f32.mrf.mxu0
  %v460 = vadd.f32 %v99, %v459
  %v461 = vpop.f32.mrf.mxu0
  %462 = vmatprep.mubr.bf16.mxu0 0
  %463 = vmatmul.mubr.bf16.gmra.mxu0 %v305
  %v464 = vpop.f32.mrf.mxu0
  %v465 = vadd.f32 %v99, %v464
  %v466 = vpop.f32.mrf.mxu0
  %v467 = vpop.f32.mrf.mxu0
  %v468 = vadd.f32 %v99, %v467
  %v469 = vpop.f32.mrf.mxu0
  %470 = vmatprep.mubr.bf16.mxu0 0
  %471 = vmatmul.mubr.bf16.gmra.mxu0 %v308
  %v472 = vpop.f32.mrf.mxu0
  %v473 = vadd.f32 %v99, %v472
  %v474 = vpop.f32.mrf.mxu0
  %v475 = vpop.f32.mrf.mxu0
  %v476 = vadd.f32 %v99, %v475
  %v477 = vpop.f32.mrf.mxu0
  %478 = vmatprep.mubr.bf16.mxu0 0
  %479 = vmatmul.mubr.bf16.gmra.mxu0 %v311
  %v480 = vpop.f32.mrf.mxu0
  %v481 = vadd.f32 %v99, %v480
  %v482 = vpop.f32.mrf.mxu0
  %v483 = vpop.f32.mrf.mxu0
  %v484 = vadd.f32 %v99, %v483
  %v485 = vpop.f32.mrf.mxu0
  %486 = vmatprep.mubr.bf16.mxu0 0
  %487 = vmatmul.mubr.bf16.gmra.mxu0 %v314
  %v488 = vpop.f32.mrf.mxu0
  %v489 = vadd.f32 %v99, %v488
  %v490 = vpop.f32.mrf.mxu0
  %v491 = vpop.f32.mrf.mxu0
  %v492 = vadd.f32 %v99, %v491
  %v493 = vpop.f32.mrf.mxu0
  %494 = vmatprep.mubr.bf16.mxu0 0
  %495 = vmatmul.mubr.bf16.gmra.mxu0 %v317
  %v496 = vpop.f32.mrf.mxu0
  %v497 = vadd.f32 %v99, %v496
  %v498 = vpop.f32.mrf.mxu0
  %v499 = vpop.f32.mrf.mxu0
  %v500 = vadd.f32 %v99, %v499
  %v501 = vpop.f32.mrf.mxu0
  %502 = vmatprep.mubr.bf16.mxu0 0
  %503 = vmatmul.mubr.bf16.gmra.mxu0 %v320
  %v504 = vpop.f32.mrf.mxu0
  %v505 = vadd.f32 %v99, %v504
  %v506 = vpop.f32.mrf.mxu0
  %v507 = vpop.f32.mrf.mxu0
  %v508 = vadd.f32 %v99, %v507
  %v509 = vpop.f32.mrf.mxu0
  %510 = vmatprep.mubr.bf16.mxu0 0
  %511 = vmatmul.mubr.bf16.gmra.mxu0 %v323
  %v512 = vpop.f32.mrf.mxu0
  %v513 = vadd.f32 %v99, %v512
  %v514 = vpop.f32.mrf.mxu0
  %v515 = vpop.f32.mrf.mxu0
  %v516 = vadd.f32 %v99, %v515
  %v517 = vpop.f32.mrf.mxu0
  %518 = vmatprep.mubr.bf16.mxu0 0
  %519 = vmatmul.mubr.bf16.gmra.mxu0 %v326
  %v520 = vpop.f32.mrf.mxu0
  %v521 = vadd.f32 %v99, %v520
  %v522 = vpop.f32.mrf.mxu0
  %v523 = vpop.f32.mrf.mxu0
  %v524 = vadd.f32 %v99, %v523
  %v525 = vpop.f32.mrf.mxu0
  %526 = vmatprep.mubr.bf16.mxu0 0
  %527 = vmatmul.mubr.bf16.gmra.mxu0 %v329
  %v528 = vpop.f32.mrf.mxu0
  %v529 = vadd.f32 %v99, %v528
  %v530 = vpop.f32.mrf.mxu0
  %v531 = vpop.f32.mrf.mxu0
  %v532 = vadd.f32 %v99, %v531
  %v533 = vpop.f32.mrf.mxu0
  %534 = vmatprep.mubr.bf16.mxu0 0
  %535 = vmatmul.mubr.bf16.gmra.mxu0 %v332
  %v536 = vpop.f32.mrf.mxu0
  %v537 = vadd.f32 %v99, %v536
  %v538 = vpop.f32.mrf.mxu0
  %v539 = vpop.f32.mrf.mxu0
  %v540 = vadd.f32 %v99, %v539
  %v541 = vpop.f32.mrf.mxu0
  %542 = vmatprep.mubr.bf16.mxu0 0
  %543 = vmatmul.mubr.bf16.gmra.mxu0 %v335
  %v544 = vpop.f32.mrf.mxu0
  %v545 = vadd.f32 %v99, %v544
  %v546 = vpop.f32.mrf.mxu0
  %v547 = vpop.f32.mrf.mxu0
  %v548 = vadd.f32 %v99, %v547
  %v549 = vpop.f32.mrf.mxu0
  %550 = vmatprep.mubr.bf16.mxu0 0
  %551 = vmatmul.mubr.bf16.gmra.mxu0 %v338
  %v552 = vpop.f32.mrf.mxu0
  %v553 = vadd.f32 %v99, %v552
  %v554 = vpop.f32.mrf.mxu0
  %v555 = vpop.f32.mrf.mxu0
  %v556 = vadd.f32 %v99, %v555
  %v557 = vpop.f32.mrf.mxu0
  %558 = vmatprep.mubr.bf16.mxu0 0
  %559 = vmatmul.mubr.bf16.gmra.mxu0 %v341
  %v560 = vpop.f32.mrf.mxu0
  %v561 = vadd.f32 %v99, %v560
  %v562 = vpop.f32.mrf.mxu0
  %v563 = vpop.f32.mrf.mxu0
  %v564 = vadd.f32 %v99, %v563
  %v565 = vpop.f32.mrf.mxu0
  %566 = vmatprep.mubr.bf16.mxu0 0
  %567 = vmatmul.mubr.bf16.gmra.mxu0 %v344
  %v568 = vpop.f32.mrf.mxu0
  %v569 = vadd.f32 %v99, %v568
  %v570 = vpop.f32.mrf.mxu0
  %v571 = vpop.f32.mrf.mxu0
  %v572 = vadd.f32 %v99, %v571
  %v573 = vpop.f32.mrf.mxu0
  %574 = vmatprep.mubr.bf16.mxu0 0
  %575 = vmatmul.mubr.bf16.gmra.mxu0 %v347
  %v576 = vpop.f32.mrf.mxu0
  %v577 = vadd.f32 %v99, %v576
  %v578 = vpop.f32.mrf.mxu0
  %v579 = vpop.f32.mrf.mxu0
  %v580 = vadd.f32 %v99, %v579
  %v581 = vpop.f32.mrf.mxu0
  %582 = vmatprep.mubr.bf16.mxu0 0
  %583 = vmatmul.mubr.bf16.gmra.mxu0 %v350
  %v584 = vpop.f32.mrf.mxu0
  %v585 = vadd.f32 %v99, %v584
  %v586 = vpop.f32.mrf.mxu0
  %v587 = vpop.f32.mrf.mxu0
  %v588 = vadd.f32 %v99, %v587
  %v589 = vpop.f32.mrf.mxu0
  %590 = vmatprep.mubr.bf16.mxu0 0
  %591 = vmatmul.mubr.bf16.gmra.mxu0 %v353
  %v592 = vpop.f32.mrf.mxu0
  %v593 = vadd.f32 %v99, %v592
  %v594 = vpop.f32.mrf.mxu0
  %v595 = vpop.f32.mrf.mxu0
  %v596 = vadd.f32 %v99, %v595
  %v597 = vpop.f32.mrf.mxu0
  %598 = vmatprep.mubr.bf16.mxu0 0
  %599 = vmatmul.mubr.bf16.gmra.mxu0 %v356
  %v600 = vpop.f32.mrf.mxu0
  %v601 = vadd.f32 %v99, %v600
  %v602 = vpop.f32.mrf.mxu0
  %v603 = vpop.f32.mrf.mxu0
  %v604 = vadd.f32 %v99, %v603
  %v605 = vpop.f32.mrf.mxu0
  %606 = vmatprep.mubr.bf16.mxu0 0
  %607 = vmatmul.mubr.bf16.gmra.mxu0 %v359
  %v608 = vpop.f32.mrf.mxu0
  %v609 = vadd.f32 %v99, %v608
  %v610 = vpop.f32.mrf.mxu0
  %v611 = vpop.f32.mrf.mxu0
  %v612 = vadd.f32 %v99, %v611
  %v613 = vpop.f32.mrf.mxu0
  %614 = vmatprep.mubr.bf16.mxu0 0
  %615 = vmatmul.mubr.bf16.gmra.mxu0 %v362
  %v616 = vpop.f32.mrf.mxu0
  %v617 = vadd.f32 %v99, %v616
  %v618 = vpop.f32.mrf.mxu0
  %v619 = vpop.f32.mrf.mxu0
  %v620 = vadd.f32 %v99, %v619
  %v621 = vpop.f32.mrf.mxu0
  %622 = vmatprep.mubr.bf16.mxu0 0
  %623 = vmatmul.mubr.bf16.gmra.mxu0 %v365
  %v624 = vpop.f32.mrf.mxu0
  %v625 = vadd.f32 %v99, %v624
  %v626 = vpop.f32.mrf.mxu0
  %v627 = vpop.f32.mrf.mxu0
  %v628 = vadd.f32 %v99, %v627
  %v629 = vpop.f32.mrf.mxu0
  %630 = vmatprep.mubr.bf16.mxu0 0
  %631 = vmatmul.mubr.bf16.gmra.mxu0 %v368
  %v632 = vpop.f32.mrf.mxu0
  %v633 = vadd.f32 %v99, %v632
  %v634 = vpop.f32.mrf.mxu0
  %v635 = vpop.f32.mrf.mxu0
  %v636 = vadd.f32 %v99, %v635
  %v637 = vpop.f32.mrf.mxu0
  %638 = vmatprep.mubr.bf16.mxu0 0
  %639 = vmatmul.mubr.bf16.gmra.mxu0 %v371
  %v640 = vpop.f32.mrf.mxu0
  %v641 = vadd.f32 %v99, %v640
  %v642 = vpop.f32.mrf.mxu0
  %v643 = vpop.f32.mrf.mxu0
  %v644 = vadd.f32 %v99, %v643
  %v645 = vpop.f32.mrf.mxu0
  %646 = vmatprep.mubr.bf16.mxu0 0
  %647 = vmatmul.mubr.bf16.gmra.mxu0 %v374
  %v648 = vpop.f32.mrf.mxu0
  %v649 = vadd.f32 %v99, %v648
  %v650 = vpop.f32.mrf.mxu0
  %v651 = vpop.f32.mrf.mxu0
  %v652 = vadd.f32 %v99, %v651
  %v653 = vpop.f32.mrf.mxu0
  %654 = vmatprep.mubr.bf16.mxu0 0
  %655 = vmatmul.mubr.bf16.gmra.mxu0 %v377
  %v656 = vpop.f32.mrf.mxu0
  %v657 = vadd.f32 %v99, %v656
  %v658 = vpop.f32.mrf.mxu0
  %v659 = vpop.f32.mrf.mxu0
  %v660 = vadd.f32 %v99, %v659
  %v661 = vpop.f32.mrf.mxu0
  %662 = vmatprep.mubr.bf16.mxu0 0
  %663 = vmatmul.mubr.bf16.gmra.mxu0 %v380
  %v664 = vpop.f32.mrf.mxu0
  %v665 = vadd.f32 %v99, %v664
  %v666 = vpop.f32.mrf.mxu0
  %v667 = vpop.f32.mrf.mxu0
  %v668 = vadd.f32 %v99, %v667
  %v669 = vpop.f32.mrf.mxu0
  %670 = vdwg.mxu0
  %v671 = vtanh.pop %v417
  %v672 = vtanh.pop %v420
  %v673 = vtanh.pop %v425
  %v674 = vtanh.pop %v428
  %v675 = vtanh.pop %v433
  %v676 = vtanh.pop %v436
  %v677 = vtanh.pop %v441
  %v678 = vtanh.pop %v444
  %v679 = vtanh.pop %v449
  %v680 = vtanh.pop %v452
  %v681 = vtanh.pop %v457
  %v682 = vtanh.pop %v460
  %v683 = vtanh.pop %v465
  %v684 = vtanh.pop %v468
  %v685 = vtanh.pop %v473
  %v686 = vtanh.pop %v476
  %v687 = vtanh.pop %v481
  %v688 = vtanh.pop %v484
  %v689 = vtanh.pop %v489
  %v690 = vtanh.pop %v492
  %v691 = vtanh.pop %v497
  %v692 = vtanh.pop %v500
  %v693 = vtanh.pop %v505
  %v694 = vtanh.pop %v508
  %v695 = vtanh.pop %v513
  %v696 = vtanh.pop %v516
  %v697 = vtanh.pop %v521
  %v698 = vtanh.pop %v524
  %v699 = vtanh.pop %v529
  %v700 = vtanh.pop %v532
  %v701 = vtanh.pop %v537
  %v702 = vtanh.pop %v540
  %v703 = vtanh.pop %v545
  %v704 = vtanh.pop %v548
  %v705 = vtanh.pop %v553
  %v706 = vtanh.pop %v556
  %v707 = vtanh.pop %v561
  %v708 = vtanh.pop %v564
  %v709 = vtanh.pop %v569
  %v710 = vtanh.pop %v572
  %v711 = vtanh.pop %v577
  %v712 = vtanh.pop %v580
  %v713 = vtanh.pop %v585
  %v714 = vtanh.pop %v588
  %v715 = vtanh.pop %v593
  %v716 = vtanh.pop %v596
  %v717 = vtanh.pop %v601
  %v718 = vtanh.pop %v604
  %v719 = vtanh.pop %v609
  %v720 = vtanh.pop %v612
  %v721 = vtanh.pop %v617
  %v722 = vtanh.pop %v620
  %v723 = vtanh.pop %v625
  %v724 = vtanh.pop %v628
  %v725 = vtanh.pop %v633
  %v726 = vtanh.pop %v636
  %v727 = vtanh.pop %v641
  %v728 = vtanh.pop %v644
  %v729 = vtanh.pop %v649
  %v730 = vtanh.pop %v652
  %v731 = vtanh.pop %v657
  %v732 = vtanh.pop %v660
  %v733 = vtanh.pop %v665
  %v734 = vtanh.pop %v668
  %v735 = vxor.u32 %v417, 2147483648
  %v736 = vxor.u32 %v420, 2147483648
  %v737 = vxor.u32 %v425, 2147483648
  %v738 = vxor.u32 %v428, 2147483648
  %v739 = vxor.u32 %v433, 2147483648
  %v740 = vxor.u32 %v436, 2147483648
  %v741 = vxor.u32 %v441, 2147483648
  %v742 = vxor.u32 %v444, 2147483648
  %v743 = vxor.u32 %v449, 2147483648
  %v744 = vxor.u32 %v452, 2147483648
  %v745 = vxor.u32 %v457, 2147483648
  %v746 = vxor.u32 %v460, 2147483648
  %v747 = vxor.u32 %v465, 2147483648
  %v748 = vxor.u32 %v468, 2147483648
  %v749 = vxor.u32 %v473, 2147483648
  %v750 = vxor.u32 %v476, 2147483648
  %v751 = vxor.u32 %v481, 2147483648
  %v752 = vxor.u32 %v484, 2147483648
  %v753 = vxor.u32 %v489, 2147483648
  %v754 = vxor.u32 %v492, 2147483648
  %v755 = vxor.u32 %v497, 2147483648
  %v756 = vxor.u32 %v500, 2147483648
  %v757 = vxor.u32 %v505, 2147483648
  %v758 = vxor.u32 %v508, 2147483648
  %v759 = vxor.u32 %v513, 2147483648
  %v760 = vxor.u32 %v516, 2147483648
  %v761 = vxor.u32 %v521, 2147483648
  %v762 = vxor.u32 %v524, 2147483648
  %v763 = vxor.u32 %v529, 2147483648
  %v764 = vxor.u32 %v532, 2147483648
  %v765 = vxor.u32 %v537, 2147483648
  %v766 = vxor.u32 %v540, 2147483648
  %v767 = vxor.u32 %v545, 2147483648
  %v768 = vxor.u32 %v548, 2147483648
  %v769 = vxor.u32 %v553, 2147483648
  %v770 = vxor.u32 %v556, 2147483648
  %v771 = vxor.u32 %v561, 2147483648
  %v772 = vxor.u32 %v564, 2147483648
  %v773 = vxor.u32 %v569, 2147483648
  %v774 = vxor.u32 %v572, 2147483648
  %v775 = vxor.u32 %v577, 2147483648
  %v776 = vxor.u32 %v580, 2147483648
  %v777 = vxor.u32 %v585, 2147483648
  %v778 = vxor.u32 %v588, 2147483648
  %v779 = vxor.u32 %v593, 2147483648
  %v780 = vxor.u32 %v596, 2147483648
  %v781 = vxor.u32 %v601, 2147483648
  %v782 = vxor.u32 %v604, 2147483648
  %v783 = vxor.u32 %v609, 2147483648
  %v784 = vxor.u32 %v612, 2147483648
  %v785 = vxor.u32 %v617, 2147483648
  %v786 = vxor.u32 %v620, 2147483648
  %v787 = vxor.u32 %v625, 2147483648
  %v788 = vxor.u32 %v628, 2147483648
  %v789 = vxor.u32 %v633, 2147483648
  %v790 = vxor.u32 %v636, 2147483648
  %v791 = vxor.u32 %v641, 2147483648
  %v792 = vxor.u32 %v644, 2147483648
  %v793 = vxor.u32 %v649, 2147483648
  %v794 = vxor.u32 %v652, 2147483648
  %v795 = vxor.u32 %v657, 2147483648
  %v796 = vxor.u32 %v660, 2147483648
  %v797 = vxor.u32 %v665, 2147483648
  %v798 = vxor.u32 %v668, 2147483648
  %v799 = vmul.f32 %v735, 1.442695
  %v800 = vpow.pop %v799
  %v801 = vmul.f32 %v736, 1.442695
  %v802 = vpow.pop %v801
  %v803 = vmul.f32 %v737, 1.442695
  %v804 = vpow.pop %v803
  %v805 = vmul.f32 %v738, 1.442695
  %v806 = vpow.pop %v805
  %v807 = vmul.f32 %v739, 1.442695
  %v808 = vpow.pop %v807
  %v809 = vmul.f32 %v740, 1.442695
  %v810 = vpow.pop %v809
  %v811 = vmul.f32 %v741, 1.442695
  %v812 = vpow.pop %v811
  %v813 = vmul.f32 %v742, 1.442695
  %v814 = vpow.pop %v813
  %v815 = vmul.f32 %v743, 1.442695
  %v816 = vpow.pop %v815
  %v817 = vmul.f32 %v744, 1.442695
  %v818 = vpow.pop %v817
  %v819 = vmul.f32 %v745, 1.442695
  %v820 = vpow.pop %v819
  %v821 = vmul.f32 %v746, 1.442695
  %v822 = vpow.pop %v821
  %v823 = vmul.f32 %v747, 1.442695
  %v824 = vpow.pop %v823
  %v825 = vmul.f32 %v748, 1.442695
  %v826 = vpow.pop %v825
  %v827 = vmul.f32 %v749, 1.442695
  %v828 = vpow.pop %v827
  %v829 = vmul.f32 %v750, 1.442695
  %v830 = vpow.pop %v829
  %v831 = vmul.f32 %v751, 1.442695
  %v832 = vpow.pop %v831
  %v833 = vmul.f32 %v752, 1.442695
  %v834 = vpow.pop %v833
  %v835 = vmul.f32 %v753, 1.442695
  %v836 = vpow.pop %v835
  %v837 = vmul.f32 %v754, 1.442695
  %v838 = vpow.pop %v837
  %v839 = vmul.f32 %v755, 1.442695
  %v840 = vpow.pop %v839
  %v841 = vmul.f32 %v756, 1.442695
  %v842 = vpow.pop %v841
  %v843 = vmul.f32 %v757, 1.442695
  %v844 = vpow.pop %v843
  %v845 = vmul.f32 %v758, 1.442695
  %v846 = vpow.pop %v845
  %v847 = vmul.f32 %v759, 1.442695
  %v848 = vpow.pop %v847
  %v849 = vmul.f32 %v760, 1.442695
  %v850 = vpow.pop %v849
  %v851 = vmul.f32 %v761, 1.442695
  %v852 = vpow.pop %v851
  %v853 = vmul.f32 %v762, 1.442695
  %v854 = vpow.pop %v853
  %v855 = vmul.f32 %v763, 1.442695
  %v856 = vpow.pop %v855
  %v857 = vmul.f32 %v764, 1.442695
  %v858 = vpow.pop %v857
  %v859 = vmul.f32 %v765, 1.442695
  %v860 = vpow.pop %v859
  %v861 = vmul.f32 %v766, 1.442695
  %v862 = vpow.pop %v861
  %v863 = vmul.f32 %v767, 1.442695
  %v864 = vpow.pop %v863
  %v865 = vmul.f32 %v768, 1.442695
  %v866 = vpow.pop %v865
  %v867 = vmul.f32 %v769, 1.442695
  %v868 = vpow.pop %v867
  %v869 = vmul.f32 %v770, 1.442695
  %v870 = vpow.pop %v869
  %v871 = vmul.f32 %v771, 1.442695
  %v872 = vpow.pop %v871
  %v873 = vmul.f32 %v772, 1.442695
  %v874 = vpow.pop %v873
  %v875 = vmul.f32 %v773, 1.442695
  %v876 = vpow.pop %v875
  %v877 = vmul.f32 %v774, 1.442695
  %v878 = vpow.pop %v877
  %v879 = vmul.f32 %v775, 1.442695
  %v880 = vpow.pop %v879
  %v881 = vmul.f32 %v776, 1.442695
  %v882 = vpow.pop %v881
  %v883 = vmul.f32 %v777, 1.442695
  %v884 = vpow.pop %v883
  %v885 = vmul.f32 %v778, 1.442695
  %v886 = vpow.pop %v885
  %v887 = vmul.f32 %v779, 1.442695
  %v888 = vpow.pop %v887
  %v889 = vmul.f32 %v780, 1.442695
  %v890 = vpow.pop %v889
  %v891 = vmul.f32 %v781, 1.442695
  %v892 = vpow.pop %v891
  %v893 = vmul.f32 %v782, 1.442695
  %v894 = vpow.pop %v893
  %v895 = vmul.f32 %v783, 1.442695
  %v896 = vpow.pop %v895
  %v897 = vmul.f32 %v784, 1.442695
  %v898 = vpow.pop %v897
  %v899 = vmul.f32 %v785, 1.442695
  %v900 = vpow.pop %v899
  %v901 = vmul.f32 %v786, 1.442695
  %v902 = vpow.pop %v901
  %v903 = vmul.f32 %v787, 1.442695
  %v904 = vpow.pop %v903
  %v905 = vmul.f32 %v788, 1.442695
  %v906 = vpow.pop %v905
  %v907 = vmul.f32 %v789, 1.442695
  %v908 = vpow.pop %v907
  %v909 = vmul.f32 %v790, 1.442695
  %v910 = vpow.pop %v909
  %v911 = vmul.f32 %v791, 1.442695
  %v912 = vpow.pop %v911
  %v913 = vmul.f32 %v792, 1.442695
  %v914 = vpow.pop %v913
  %v915 = vmul.f32 %v793, 1.442695
  %v916 = vpow.pop %v915
  %v917 = vmul.f32 %v794, 1.442695
  %v918 = vpow.pop %v917
  %v919 = vmul.f32 %v795, 1.442695
  %v920 = vpow.pop %v919
  %v921 = vmul.f32 %v796, 1.442695
  %v922 = vpow.pop %v921
  %v923 = vmul.f32 %v797, 1.442695
  %v924 = vpow.pop %v923
  %v925 = vmul.f32 %v798, 1.442695
  %v926 = vpow.pop %v925
  %v927 = vadd.f32 %v800, 1.0
  %v928 = vadd.f32 %v802, 1.0
  %v929 = vadd.f32 %v804, 1.0
  %v930 = vadd.f32 %v806, 1.0
  %v931 = vadd.f32 %v808, 1.0
  %v932 = vadd.f32 %v810, 1.0
  %v933 = vadd.f32 %v812, 1.0
  %v934 = vadd.f32 %v814, 1.0
  %v935 = vadd.f32 %v816, 1.0
  %v936 = vadd.f32 %v818, 1.0
  %v937 = vadd.f32 %v820, 1.0
  %v938 = vadd.f32 %v822, 1.0
  %v939 = vadd.f32 %v824, 1.0
  %v940 = vadd.f32 %v826, 1.0
  %v941 = vadd.f32 %v828, 1.0
  %v942 = vadd.f32 %v830, 1.0
  %v943 = vadd.f32 %v832, 1.0
  %v944 = vadd.f32 %v834, 1.0
  %v945 = vadd.f32 %v836, 1.0
  %v946 = vadd.f32 %v838, 1.0
  %v947 = vadd.f32 %v840, 1.0
  %v948 = vadd.f32 %v842, 1.0
  %v949 = vadd.f32 %v844, 1.0
  %v950 = vadd.f32 %v846, 1.0
  %v951 = vadd.f32 %v848, 1.0
  %v952 = vadd.f32 %v850, 1.0
  %v953 = vadd.f32 %v852, 1.0
  %v954 = vadd.f32 %v854, 1.0
  %v955 = vadd.f32 %v856, 1.0
  %v956 = vadd.f32 %v858, 1.0
  %v957 = vadd.f32 %v860, 1.0
  %v958 = vadd.f32 %v862, 1.0
  %v959 = vadd.f32 %v864, 1.0
  %v960 = vadd.f32 %v866, 1.0
  %v961 = vadd.f32 %v868, 1.0
  %v962 = vadd.f32 %v870, 1.0
  %v963 = vadd.f32 %v872, 1.0
  %v964 = vadd.f32 %v874, 1.0
  %v965 = vadd.f32 %v876, 1.0
  %v966 = vadd.f32 %v878, 1.0
  %v967 = vadd.f32 %v880, 1.0
  %v968 = vadd.f32 %v882, 1.0
  %v969 = vadd.f32 %v884, 1.0
  %v970 = vadd.f32 %v886, 1.0
  %v971 = vadd.f32 %v888, 1.0
  %v972 = vadd.f32 %v890, 1.0
  %v973 = vadd.f32 %v892, 1.0
  %v974 = vadd.f32 %v894, 1.0
  %v975 = vadd.f32 %v896, 1.0
  %v976 = vadd.f32 %v898, 1.0
  %v977 = vadd.f32 %v900, 1.0
  %v978 = vadd.f32 %v902, 1.0
  %v979 = vadd.f32 %v904, 1.0
  %v980 = vadd.f32 %v906, 1.0
  %v981 = vadd.f32 %v908, 1.0
  %v982 = vadd.f32 %v910, 1.0
  %v983 = vadd.f32 %v912, 1.0
  %v984 = vadd.f32 %v914, 1.0
  %v985 = vadd.f32 %v916, 1.0
  %v986 = vadd.f32 %v918, 1.0
  %v987 = vadd.f32 %v920, 1.0
  %v988 = vadd.f32 %v922, 1.0
  %v989 = vadd.f32 %v924, 1.0
  %v990 = vadd.f32 %v926, 1.0
  %v991 = vrcp.pop %v927
  %v992 = vmul.f32 1.0, %v991
  %v993 = vrcp.pop %v928
  %v994 = vmul.f32 1.0, %v993
  %v995 = vrcp.pop %v929
  %v996 = vmul.f32 1.0, %v995
  %v997 = vrcp.pop %v930
  %v998 = vmul.f32 1.0, %v997
  %v999 = vrcp.pop %v931
  %v1000 = vmul.f32 1.0, %v999
  %v1001 = vrcp.pop %v932
  %v1002 = vmul.f32 1.0, %v1001
  %v1003 = vrcp.pop %v933
  %v1004 = vmul.f32 1.0, %v1003
  %v1005 = vrcp.pop %v934
  %v1006 = vmul.f32 1.0, %v1005
  %v1007 = vrcp.pop %v935
  %v1008 = vmul.f32 1.0, %v1007
  %v1009 = vrcp.pop %v936
  %v1010 = vmul.f32 1.0, %v1009
  %v1011 = vrcp.pop %v937
  %v1012 = vmul.f32 1.0, %v1011
  %v1013 = vrcp.pop %v938
  %v1014 = vmul.f32 1.0, %v1013
  %v1015 = vrcp.pop %v939
  %v1016 = vmul.f32 1.0, %v1015
  %v1017 = vrcp.pop %v940
  %v1018 = vmul.f32 1.0, %v1017
  %v1019 = vrcp.pop %v941
  %v1020 = vmul.f32 1.0, %v1019
  %v1021 = vrcp.pop %v942
  %v1022 = vmul.f32 1.0, %v1021
  %v1023 = vrcp.pop %v943
  %v1024 = vmul.f32 1.0, %v1023
  %v1025 = vrcp.pop %v944
  %v1026 = vmul.f32 1.0, %v1025
  %v1027 = vrcp.pop %v945
  %v1028 = vmul.f32 1.0, %v1027
  %v1029 = vrcp.pop %v946
  %v1030 = vmul.f32 1.0, %v1029
  %v1031 = vrcp.pop %v947
  %v1032 = vmul.f32 1.0, %v1031
  %v1033 = vrcp.pop %v948
  %v1034 = vmul.f32 1.0, %v1033
  %v1035 = vrcp.pop %v949
  %v1036 = vmul.f32 1.0, %v1035
  %v1037 = vrcp.pop %v950
  %v1038 = vmul.f32 1.0, %v1037
  %v1039 = vrcp.pop %v951
  %v1040 = vmul.f32 1.0, %v1039
  %v1041 = vrcp.pop %v952
  %v1042 = vmul.f32 1.0, %v1041
  %v1043 = vrcp.pop %v953
  %v1044 = vmul.f32 1.0, %v1043
  %v1045 = vrcp.pop %v954
  %v1046 = vmul.f32 1.0, %v1045
  %v1047 = vrcp.pop %v955
  %v1048 = vmul.f32 1.0, %v1047
  %v1049 = vrcp.pop %v956
  %v1050 = vmul.f32 1.0, %v1049
  %v1051 = vrcp.pop %v957
  %v1052 = vmul.f32 1.0, %v1051
  %v1053 = vrcp.pop %v958
  %v1054 = vmul.f32 1.0, %v1053
  %v1055 = vrcp.pop %v959
  %v1056 = vmul.f32 1.0, %v1055
  %v1057 = vrcp.pop %v960
  %v1058 = vmul.f32 1.0, %v1057
  %v1059 = vrcp.pop %v961
  %v1060 = vmul.f32 1.0, %v1059
  %v1061 = vrcp.pop %v962
  %v1062 = vmul.f32 1.0, %v1061
  %v1063 = vrcp.pop %v963
  %v1064 = vmul.f32 1.0, %v1063
  %v1065 = vrcp.pop %v964
  %v1066 = vmul.f32 1.0, %v1065
  %v1067 = vrcp.pop %v965
  %v1068 = vmul.f32 1.0, %v1067
  %v1069 = vrcp.pop %v966
  %v1070 = vmul.f32 1.0, %v1069
  %v1071 = vrcp.pop %v967
  %v1072 = vmul.f32 1.0, %v1071
  %v1073 = vrcp.pop %v968
  %v1074 = vmul.f32 1.0, %v1073
  %v1075 = vrcp.pop %v969
  %v1076 = vmul.f32 1.0, %v1075
  %v1077 = vrcp.pop %v970
  %v1078 = vmul.f32 1.0, %v1077
  %v1079 = vrcp.pop %v971
  %v1080 = vmul.f32 1.0, %v1079
  %v1081 = vrcp.pop %v972
  %v1082 = vmul.f32 1.0, %v1081
  %v1083 = vrcp.pop %v973
  %v1084 = vmul.f32 1.0, %v1083
  %v1085 = vrcp.pop %v974
  %v1086 = vmul.f32 1.0, %v1085
  %v1087 = vrcp.pop %v975
  %v1088 = vmul.f32 1.0, %v1087
  %v1089 = vrcp.pop %v976
  %v1090 = vmul.f32 1.0, %v1089
  %v1091 = vrcp.pop %v977
  %v1092 = vmul.f32 1.0, %v1091
  %v1093 = vrcp.pop %v978
  %v1094 = vmul.f32 1.0, %v1093
  %v1095 = vrcp.pop %v979
  %v1096 = vmul.f32 1.0, %v1095
  %v1097 = vrcp.pop %v980
  %v1098 = vmul.f32 1.0, %v1097
  %v1099 = vrcp.pop %v981
  %v1100 = vmul.f32 1.0, %v1099
  %v1101 = vrcp.pop %v982
  %v1102 = vmul.f32 1.0, %v1101
  %v1103 = vrcp.pop %v983
  %v1104 = vmul.f32 1.0, %v1103
  %v1105 = vrcp.pop %v984
  %v1106 = vmul.f32 1.0, %v1105
  %v1107 = vrcp.pop %v985
  %v1108 = vmul.f32 1.0, %v1107
  %v1109 = vrcp.pop %v986
  %v1110 = vmul.f32 1.0, %v1109
  %v1111 = vrcp.pop %v987
  %v1112 = vmul.f32 1.0, %v1111
  %v1113 = vrcp.pop %v988
  %v1114 = vmul.f32 1.0, %v1113
  %v1115 = vrcp.pop %v989
  %v1116 = vmul.f32 1.0, %v1115
  %v1117 = vrcp.pop %v990
  %v1118 = vmul.f32 1.0, %v1117
  %1183 = vrot.lane.b32.xlu0 %v992, 64
  %v1184 = vpop.permute.xlu0 %1183
  %1185 = vrot.lane.b32.xlu0 %v994, 64
  %v1186 = vpop.permute.xlu0 %1185
  %1187 = vrot.lane.b32.xlu0 %v996, 64
  %v1188 = vpop.permute.xlu0 %1187
  %1189 = vrot.lane.b32.xlu0 %v998, 64
  %v1190 = vpop.permute.xlu0 %1189
  %1191 = vrot.lane.b32.xlu0 %v1000, 64
  %v1192 = vpop.permute.xlu0 %1191
  %1193 = vrot.lane.b32.xlu0 %v1002, 64
  %v1194 = vpop.permute.xlu0 %1193
  %1195 = vrot.lane.b32.xlu0 %v1004, 64
  %v1196 = vpop.permute.xlu0 %1195
  %1197 = vrot.lane.b32.xlu0 %v1006, 64
  %v1198 = vpop.permute.xlu0 %1197
  %1199 = vrot.lane.b32.xlu0 %v1008, 64
  %v1200 = vpop.permute.xlu0 %1199
  %1201 = vrot.lane.b32.xlu0 %v1010, 64
  %v1202 = vpop.permute.xlu0 %1201
  %1203 = vrot.lane.b32.xlu0 %v1012, 64
  %v1204 = vpop.permute.xlu0 %1203
  %1205 = vrot.lane.b32.xlu0 %v1014, 64
  %v1206 = vpop.permute.xlu0 %1205
  %1207 = vrot.lane.b32.xlu0 %v1016, 64
  %v1208 = vpop.permute.xlu0 %1207
  %1209 = vrot.lane.b32.xlu0 %v1018, 64
  %v1210 = vpop.permute.xlu0 %1209
  %1211 = vrot.lane.b32.xlu0 %v1020, 64
  %v1212 = vpop.permute.xlu0 %1211
  %1213 = vrot.lane.b32.xlu0 %v1022, 64
  %v1214 = vpop.permute.xlu0 %1213
  %1215 = vrot.lane.b32.xlu0 %v1024, 64
  %v1216 = vpop.permute.xlu0 %1215
  %1217 = vrot.lane.b32.xlu0 %v1026, 64
  %v1218 = vpop.permute.xlu0 %1217
  %1219 = vrot.lane.b32.xlu0 %v1028, 64
  %v1220 = vpop.permute.xlu0 %1219
  %1221 = vrot.lane.b32.xlu0 %v1030, 64
  %v1222 = vpop.permute.xlu0 %1221
  %1223 = vrot.lane.b32.xlu0 %v1032, 64
  %v1224 = vpop.permute.xlu0 %1223
  %1225 = vrot.lane.b32.xlu0 %v1034, 64
  %v1226 = vpop.permute.xlu0 %1225
  %1227 = vrot.lane.b32.xlu0 %v1036, 64
  %v1228 = vpop.permute.xlu0 %1227
  %1229 = vrot.lane.b32.xlu0 %v1038, 64
  %v1230 = vpop.permute.xlu0 %1229
  %1231 = vrot.lane.b32.xlu0 %v1040, 64
  %v1232 = vpop.permute.xlu0 %1231
  %1233 = vrot.lane.b32.xlu0 %v1042, 64
  %v1234 = vpop.permute.xlu0 %1233
  %1235 = vrot.lane.b32.xlu0 %v1044, 64
  %v1236 = vpop.permute.xlu0 %1235
  %1237 = vrot.lane.b32.xlu0 %v1046, 64
  %v1238 = vpop.permute.xlu0 %1237
  %1239 = vrot.lane.b32.xlu0 %v1048, 64
  %v1240 = vpop.permute.xlu0 %1239
  %1241 = vrot.lane.b32.xlu0 %v1050, 64
  %v1242 = vpop.permute.xlu0 %1241
  %1243 = vrot.lane.b32.xlu0 %v1052, 64
  %v1244 = vpop.permute.xlu0 %1243
  %1245 = vrot.lane.b32.xlu0 %v1054, 64
  %v1246 = vpop.permute.xlu0 %1245
  %1247 = vrot.lane.b32.xlu0 %v1056, 64
  %v1248 = vpop.permute.xlu0 %1247
  %1249 = vrot.lane.b32.xlu0 %v1058, 64
  %v1250 = vpop.permute.xlu0 %1249
  %1251 = vrot.lane.b32.xlu0 %v1060, 64
  %v1252 = vpop.permute.xlu0 %1251
  %1253 = vrot.lane.b32.xlu0 %v1062, 64
  %v1254 = vpop.permute.xlu0 %1253
  %1255 = vrot.lane.b32.xlu0 %v1064, 64
  %v1256 = vpop.permute.xlu0 %1255
  %1257 = vrot.lane.b32.xlu0 %v1066, 64
  %v1258 = vpop.permute.xlu0 %1257
  %1259 = vrot.lane.b32.xlu0 %v1068, 64
  %v1260 = vpop.permute.xlu0 %1259
  %1261 = vrot.lane.b32.xlu0 %v1070, 64
  %v1262 = vpop.permute.xlu0 %1261
  %1263 = vrot.lane.b32.xlu0 %v1072, 64
  %v1264 = vpop.permute.xlu0 %1263
  %1265 = vrot.lane.b32.xlu0 %v1074, 64
  %v1266 = vpop.permute.xlu0 %1265
  %1267 = vrot.lane.b32.xlu0 %v1076, 64
  %v1268 = vpop.permute.xlu0 %1267
  %1269 = vrot.lane.b32.xlu0 %v1078, 64
  %v1270 = vpop.permute.xlu0 %1269
  %1271 = vrot.lane.b32.xlu0 %v1080, 64
  %v1272 = vpop.permute.xlu0 %1271
  %1273 = vrot.lane.b32.xlu0 %v1082, 64
  %v1274 = vpop.permute.xlu0 %1273
  %1275 = vrot.lane.b32.xlu0 %v1084, 64
  %v1276 = vpop.permute.xlu0 %1275
  %1277 = vrot.lane.b32.xlu0 %v1086, 64
  %v1278 = vpop.permute.xlu0 %1277
  %1279 = vrot.lane.b32.xlu0 %v1088, 64
  %v1280 = vpop.permute.xlu0 %1279
  %1281 = vrot.lane.b32.xlu0 %v1090, 64
  %v1282 = vpop.permute.xlu0 %1281
  %1283 = vrot.lane.b32.xlu0 %v1092, 64
  %v1284 = vpop.permute.xlu0 %1283
  %1285 = vrot.lane.b32.xlu0 %v1094, 64
  %v1286 = vpop.permute.xlu0 %1285
  %1287 = vrot.lane.b32.xlu0 %v1096, 64
  %v1288 = vpop.permute.xlu0 %1287
  %1289 = vrot.lane.b32.xlu0 %v1098, 64
  %v1290 = vpop.permute.xlu0 %1289
  %1291 = vrot.lane.b32.xlu0 %v1100, 64
  %v1292 = vpop.permute.xlu0 %1291
  %1293 = vrot.lane.b32.xlu0 %v1102, 64
  %v1294 = vpop.permute.xlu0 %1293
  %1295 = vrot.lane.b32.xlu0 %v1104, 64
  %v1296 = vpop.permute.xlu0 %1295
  %1297 = vrot.lane.b32.xlu0 %v1106, 64
  %v1298 = vpop.permute.xlu0 %1297
  %1299 = vrot.lane.b32.xlu0 %v1108, 64
  %v1300 = vpop.permute.xlu0 %1299
  %1301 = vrot.lane.b32.xlu0 %v1110, 64
  %v1302 = vpop.permute.xlu0 %1301
  %1303 = vrot.lane.b32.xlu0 %v1112, 64
  %v1304 = vpop.permute.xlu0 %1303
  %1305 = vrot.lane.b32.xlu0 %v1114, 64
  %v1306 = vpop.permute.xlu0 %1305
  %1307 = vrot.lane.b32.xlu0 %v1116, 64
  %v1308 = vpop.permute.xlu0 %1307
  %1309 = vrot.lane.b32.xlu0 %v1118, 64
  %v1310 = vpop.permute.xlu0 %1309
  %v1375 = vmul.f32 %v671, %v1184
  %v1376 = vmul.f32 %v672, %v1186
  %v1377 = vmul.f32 %v673, %v1188
  %v1378 = vmul.f32 %v674, %v1190
  %v1379 = vmul.f32 %v675, %v1192
  %v1380 = vmul.f32 %v676, %v1194
  %v1381 = vmul.f32 %v677, %v1196
  %v1382 = vmul.f32 %v678, %v1198
  %v1383 = vmul.f32 %v679, %v1200
  %v1384 = vmul.f32 %v680, %v1202
  %v1385 = vmul.f32 %v681, %v1204
  %v1386 = vmul.f32 %v682, %v1206
  %v1387 = vmul.f32 %v683, %v1208
  %v1388 = vmul.f32 %v684, %v1210
  %v1389 = vmul.f32 %v685, %v1212
  %v1390 = vmul.f32 %v686, %v1214
  %v1391 = vmul.f32 %v687, %v1216
  %v1392 = vmul.f32 %v688, %v1218
  %v1393 = vmul.f32 %v689, %v1220
  %v1394 = vmul.f32 %v690, %v1222
  %v1395 = vmul.f32 %v691, %v1224
  %v1396 = vmul.f32 %v692, %v1226
  %v1397 = vmul.f32 %v693, %v1228
  %v1398 = vmul.f32 %v694, %v1230
  %v1399 = vmul.f32 %v695, %v1232
  %v1400 = vmul.f32 %v696, %v1234
  %v1401 = vmul.f32 %v697, %v1236
  %v1402 = vmul.f32 %v698, %v1238
  %v1403 = vmul.f32 %v699, %v1240
  %v1404 = vmul.f32 %v700, %v1242
  %v1405 = vmul.f32 %v701, %v1244
  %v1406 = vmul.f32 %v702, %v1246
  %v1407 = vmul.f32 %v703, %v1248
  %v1408 = vmul.f32 %v704, %v1250
  %v1409 = vmul.f32 %v705, %v1252
  %v1410 = vmul.f32 %v706, %v1254
  %v1411 = vmul.f32 %v707, %v1256
  %v1412 = vmul.f32 %v708, %v1258
  %v1413 = vmul.f32 %v709, %v1260
  %v1414 = vmul.f32 %v710, %v1262
  %v1415 = vmul.f32 %v711, %v1264
  %v1416 = vmul.f32 %v712, %v1266
  %v1417 = vmul.f32 %v713, %v1268
  %v1418 = vmul.f32 %v714, %v1270
  %v1419 = vmul.f32 %v715, %v1272
  %v1420 = vmul.f32 %v716, %v1274
  %v1421 = vmul.f32 %v717, %v1276
  %v1422 = vmul.f32 %v718, %v1278
  %v1423 = vmul.f32 %v719, %v1280
  %v1424 = vmul.f32 %v720, %v1282
  %v1425 = vmul.f32 %v721, %v1284
  %v1426 = vmul.f32 %v722, %v1286
  %v1427 = vmul.f32 %v723, %v1288
  %v1428 = vmul.f32 %v724, %v1290
  %v1429 = vmul.f32 %v725, %v1292
  %v1430 = vmul.f32 %v726, %v1294
  %v1431 = vmul.f32 %v727, %v1296
  %v1432 = vmul.f32 %v728, %v1298
  %v1433 = vmul.f32 %v729, %v1300
  %v1434 = vmul.f32 %v730, %v1302
  %v1435 = vmul.f32 %v731, %v1304
  %v1436 = vmul.f32 %v732, %v1306
  %v1437 = vmul.f32 %v733, %v1308
  %v1438 = vmul.f32 %v734, %v1310
  %v1439 = vld [vmem:[%s3] sm:$0xff]
  %v1441 = vsel %vm285, %v1439, 0
  %v1444 = vsel %vm285, %v1375, 0
  %v1447 = vsel %vm285, %v1376, 0
  %v1450 = vsel %vm285, %v1377, 0
  %v1453 = vsel %vm285, %v1378, 0
  %v1456 = vsel %vm285, %v1379, 0
  %v1459 = vsel %vm285, %v1380, 0
  %v1462 = vsel %vm285, %v1381, 0
  %v1465 = vsel %vm285, %v1382, 0
  %v1468 = vsel %vm285, %v1383, 0
  %v1471 = vsel %vm285, %v1384, 0
  %v1474 = vsel %vm285, %v1385, 0
  %v1477 = vsel %vm285, %v1386, 0
  %v1480 = vsel %vm285, %v1387, 0
  %v1483 = vsel %vm285, %v1388, 0
  %v1486 = vsel %vm285, %v1389, 0
  %v1489 = vsel %vm285, %v1390, 0
  %v1492 = vsel %vm285, %v1391, 0
  %v1495 = vsel %vm285, %v1392, 0
  %v1498 = vsel %vm285, %v1393, 0
  %v1501 = vsel %vm285, %v1394, 0
  %v1504 = vsel %vm285, %v1395, 0
  %v1507 = vsel %vm285, %v1396, 0
  %v1510 = vsel %vm285, %v1397, 0
  %v1513 = vsel %vm285, %v1398, 0
  %v1516 = vsel %vm285, %v1399, 0
  %v1519 = vsel %vm285, %v1400, 0
  %v1522 = vsel %vm285, %v1401, 0
  %v1525 = vsel %vm285, %v1402, 0
  %v1528 = vsel %vm285, %v1403, 0
  %v1531 = vsel %vm285, %v1404, 0
  %v1534 = vsel %vm285, %v1405, 0
  %v1537 = vsel %vm285, %v1406, 0
  %v1540 = vsel %vm285, %v1407, 0
  %v1543 = vsel %vm285, %v1408, 0
  %v1546 = vsel %vm285, %v1409, 0
  %v1549 = vsel %vm285, %v1410, 0
  %v1552 = vsel %vm285, %v1411, 0
  %v1555 = vsel %vm285, %v1412, 0
  %v1558 = vsel %vm285, %v1413, 0
  %v1561 = vsel %vm285, %v1414, 0
  %v1564 = vsel %vm285, %v1415, 0
  %v1567 = vsel %vm285, %v1416, 0
  %v1570 = vsel %vm285, %v1417, 0
  %v1573 = vsel %vm285, %v1418, 0
  %v1576 = vsel %vm285, %v1419, 0
  %v1579 = vsel %vm285, %v1420, 0
  %v1582 = vsel %vm285, %v1421, 0
  %v1585 = vsel %vm285, %v1422, 0
  %v1588 = vsel %vm285, %v1423, 0
  %v1591 = vsel %vm285, %v1424, 0
  %v1594 = vsel %vm285, %v1425, 0
  %v1597 = vsel %vm285, %v1426, 0
  %v1600 = vsel %vm285, %v1427, 0
  %v1603 = vsel %vm285, %v1428, 0
  %v1606 = vsel %vm285, %v1429, 0
  %v1609 = vsel %vm285, %v1430, 0
  %v1612 = vsel %vm285, %v1431, 0
  %v1615 = vsel %vm285, %v1432, 0
  %v1618 = vsel %vm285, %v1433, 0
  %v1621 = vsel %vm285, %v1434, 0
  %v1624 = vsel %vm285, %v1435, 0
  %v1627 = vsel %vm285, %v1436, 0
  %v1630 = vsel %vm285, %v1437, 0
  %v1633 = vsel %vm285, %v1438, 0
  %1635 = vmatprep.subr.mxu0 0.0
  %1636 = vmatpush1.xpose.msra.mxu0 %v1489
  %1637 = vmatprep.subr.mxu0 0.0
  %1638 = vmatpush1.xpose.msra.mxu0 %v1486
  %1639 = vmatprep.subr.mxu0 0.0
  %1640 = vmatpush1.xpose.msra.mxu0 %v1483
  %1641 = vmatprep.subr.mxu0 0.0
  %1642 = vmatpush1.xpose.msra.mxu0 %v1480
  %1643 = vmatprep.subr.mxu0 0.0
  %1644 = vmatpush1.xpose.msra.mxu0 %v1477
  %1645 = vmatprep.subr.mxu0 0.0
  %1646 = vmatpush1.xpose.msra.mxu0 %v1474
  %1647 = vmatprep.subr.mxu0 0.0
  %1648 = vmatpush1.xpose.msra.mxu0 %v1471
  %1649 = vmatprep.subr.mxu0 0.0
  %1650 = vmatpush1.xpose.msra.mxu0 %v1468
  %1651 = vmatprep.subr.mxu0 0.0
  %1652 = vmatpush1.xpose.msra.mxu0 %v1465
  %1653 = vmatprep.subr.mxu0 0.0
  %1654 = vmatpush1.xpose.msra.mxu0 %v1462
  %1655 = vmatprep.subr.mxu0 0.0
  %1656 = vmatpush1.xpose.msra.mxu0 %v1459
  %1657 = vmatprep.subr.mxu0 0.0
  %1658 = vmatpush1.xpose.msra.mxu0 %v1456
  %1659 = vmatprep.subr.mxu0 0.0
  %1660 = vmatpush1.xpose.msra.mxu0 %v1453
  %1661 = vmatprep.subr.mxu0 0.0
  %1662 = vmatpush1.xpose.msra.mxu0 %v1450
  %1663 = vmatprep.subr.mxu0 0.0
  %1664 = vmatpush1.xpose.msra.mxu0 %v1447
  %1665 = vmatprep.subr.mxu0 0.0
  %1666 = vmatpush1.xpose.msra.mxu0 %v1444
  %1667 = vmatprep.subr.mxu0 0.0
  %1668 = vmatpush2.xpose.msra.mxu0 %v1537
  %1669 = vmatprep.subr.mxu0 0.0
  %1670 = vmatpush2.xpose.msra.mxu0 %v1534
  %1671 = vmatprep.subr.mxu0 0.0
  %1672 = vmatpush2.xpose.msra.mxu0 %v1531
  %1673 = vmatprep.subr.mxu0 0.0
  %1674 = vmatpush2.xpose.msra.mxu0 %v1528
  %1675 = vmatprep.subr.mxu0 0.0
  %1676 = vmatpush2.xpose.msra.mxu0 %v1525
  %1677 = vmatprep.subr.mxu0 0.0
  %1678 = vmatpush2.xpose.msra.mxu0 %v1522
  %1679 = vmatprep.subr.mxu0 0.0
  %1680 = vmatpush2.xpose.msra.mxu0 %v1519
  %1681 = vmatprep.subr.mxu0 0.0
  %1682 = vmatpush2.xpose.msra.mxu0 %v1516
  %1683 = vmatprep.subr.mxu0 0.0
  %1684 = vmatpush2.xpose.msra.mxu0 %v1513
  %1685 = vmatprep.subr.mxu0 0.0
  %1686 = vmatpush2.xpose.msra.mxu0 %v1510
  %1687 = vmatprep.subr.mxu0 0.0
  %1688 = vmatpush2.xpose.msra.mxu0 %v1507
  %1689 = vmatprep.subr.mxu0 0.0
  %1690 = vmatpush2.xpose.msra.mxu0 %v1504
  %1691 = vmatprep.subr.mxu0 0.0
  %1692 = vmatpush2.xpose.msra.mxu0 %v1501
  %1693 = vmatprep.subr.mxu0 0.0
  %1694 = vmatpush2.xpose.msra.mxu0 %v1498
  %1695 = vmatprep.subr.mxu0 0.0
  %1696 = vmatpush2.xpose.msra.mxu0 %v1495
  %1697 = vmatprep.subr.mxu0 0.0
  %1698 = vmatpush2.xpose.msra.mxu0 %v1492
  %1699 = vmatprep.mubr.f32.mxu0 0.0
  %1700 = vmatmul.mubr.f32.gmra.mxu0 %v1441
  %v1701 = vpop.f32.mrf.mxu0
  %v1702 = vadd.f32 0.0, %v1701
  %v1703 = vpop.f32.mrf.mxu0
  %v1704 = vadd.f32 0.0, %v1703
  %1705 = vdwg.mxu0
  %1706 = vmatprep.subr.mxu0 0.0
  %1707 = vmatpush1.xpose.msra.mxu0 %v1585
  %1708 = vmatprep.subr.mxu0 0.0
  %1709 = vmatpush1.xpose.msra.mxu0 %v1582
  %1710 = vmatprep.subr.mxu0 0.0
  %1711 = vmatpush1.xpose.msra.mxu0 %v1579
  %1712 = vmatprep.subr.mxu0 0.0
  %1713 = vmatpush1.xpose.msra.mxu0 %v1576
  %1714 = vmatprep.subr.mxu0 0.0
  %1715 = vmatpush1.xpose.msra.mxu0 %v1573
  %1716 = vmatprep.subr.mxu0 0.0
  %1717 = vmatpush1.xpose.msra.mxu0 %v1570
  %1718 = vmatprep.subr.mxu0 0.0
  %1719 = vmatpush1.xpose.msra.mxu0 %v1567
  %1720 = vmatprep.subr.mxu0 0.0
  %1721 = vmatpush1.xpose.msra.mxu0 %v1564
  %1722 = vmatprep.subr.mxu0 0.0
  %1723 = vmatpush1.xpose.msra.mxu0 %v1561
  %1724 = vmatprep.subr.mxu0 0.0
  %1725 = vmatpush1.xpose.msra.mxu0 %v1558
  %1726 = vmatprep.subr.mxu0 0.0
  %1727 = vmatpush1.xpose.msra.mxu0 %v1555
  %1728 = vmatprep.subr.mxu0 0.0
  %1729 = vmatpush1.xpose.msra.mxu0 %v1552
  %1730 = vmatprep.subr.mxu0 0.0
  %1731 = vmatpush1.xpose.msra.mxu0 %v1549
  %1732 = vmatprep.subr.mxu0 0.0
  %1733 = vmatpush1.xpose.msra.mxu0 %v1546
  %1734 = vmatprep.subr.mxu0 0.0
  %1735 = vmatpush1.xpose.msra.mxu0 %v1543
  %1736 = vmatprep.subr.mxu0 0.0
  %1737 = vmatpush1.xpose.msra.mxu0 %v1540
  %1738 = vmatprep.subr.mxu0 0.0
  %1739 = vmatpush2.xpose.msra.mxu0 %v1633
  %1740 = vmatprep.subr.mxu0 0.0
  %1741 = vmatpush2.xpose.msra.mxu0 %v1630
  %1742 = vmatprep.subr.mxu0 0.0
  %1743 = vmatpush2.xpose.msra.mxu0 %v1627
  %1744 = vmatprep.subr.mxu0 0.0
  %1745 = vmatpush2.xpose.msra.mxu0 %v1624
  %1746 = vmatprep.subr.mxu0 0.0
  %1747 = vmatpush2.xpose.msra.mxu0 %v1621
  %1748 = vmatprep.subr.mxu0 0.0
  %1749 = vmatpush2.xpose.msra.mxu0 %v1618
  %1750 = vmatprep.subr.mxu0 0.0
  %1751 = vmatpush2.xpose.msra.mxu0 %v1615
  %1752 = vmatprep.subr.mxu0 0.0
  %1753 = vmatpush2.xpose.msra.mxu0 %v1612
  %1754 = vmatprep.subr.mxu0 0.0
  %1755 = vmatpush2.xpose.msra.mxu0 %v1609
  %1756 = vmatprep.subr.mxu0 0.0
  %1757 = vmatpush2.xpose.msra.mxu0 %v1606
  %1758 = vmatprep.subr.mxu0 0.0
  %1759 = vmatpush2.xpose.msra.mxu0 %v1603
  %1760 = vmatprep.subr.mxu0 0.0
  %1761 = vmatpush2.xpose.msra.mxu0 %v1600
  %1762 = vmatprep.subr.mxu0 0.0
  %1763 = vmatpush2.xpose.msra.mxu0 %v1597
  %1764 = vmatprep.subr.mxu0 0.0
  %1765 = vmatpush2.xpose.msra.mxu0 %v1594
  %1766 = vmatprep.subr.mxu0 0.0
  %1767 = vmatpush2.xpose.msra.mxu0 %v1591
  %1768 = vmatprep.subr.mxu0 0.0
  %1769 = vmatpush2.xpose.msra.mxu0 %v1588
  %1770 = vmatprep.mubr.f32.mxu0 0.0
  %1771 = vmatmul.mubr.f32.gmra.mxu0 %v1441
  %v1772 = vpop.f32.mrf.mxu0
  %v1773 = vadd.f32 0.0, %v1772
  %v1774 = vpop.f32.mrf.mxu0
  %v1775 = vadd.f32 0.0, %v1774
  %1776 = vdwg.mxu0
  %s1777 = sld [smem:[#allocation2]]
  %v1778 = vstv %s1777
  %v1779 = vadd.f32 %v1702, %v1778
  %v1780 = vadd.f32 %v1704, %v1778
  %v1781 = vadd.f32 %v1773, %v1778
  %v1782 = vadd.f32 %v1775, %v1778
  %v1787 = vcombine.low %v1779, %v1780
  %v1788 = vcombine.low %v1781, %v1782
  %v1790 = vunpack.c.l.s4 1966171168
  %v1791 = vunpack.c.0.s8 %v1790
  %v1792 = vlaneseq
  %v1793 = vshrl.u32 %v1792, 7
  %v1794 = vsub.s32 %v1791, %v1793
  %v1795 = vrot.slane %v1787, %v1794
  %v1797 = vunpack.c.l.s4 1966171168
  %v1798 = vunpack.c.0.s8 %v1797
  %v1799 = vlaneseq
  %v1800 = vshrl.u32 %v1799, 7
  %v1801 = vsub.s32 %v1798, %v1800
  %v1802 = vrot.slane %v1788, %v1801
  %v1803 = vcombine.low %v1795, %v1802
  %v1805 = vunpack.c.l.s4 1966171168
  %v1806 = vunpack.c.0.s8 %v1805
  %v1807 = vlaneseq
  %v1808 = vshrl.u32 %v1807, 7
  %v1809 = vsub.s32 %v1806, %v1808
  %v1810 = vrot.slane %v1803, %v1809
  %s1812 = smul.u32 0, 4
  %s1813 = scalar_lea.vmem %s5, %s1812
  %v1814 = vlaneseq
  %vm1815 = vcmp.ge.s32.totalorder %v1814, 0
  %vm1816 = vcmp.lt.s32.totalorder %v1814, 512
  %vm1817 = vmand %vm1815, %vm1816
  %1818 = vst.msk [vmem:[%s1813] sm:$0xf] %vm1817, %v1810
  %p1819 = scmp.eq.s32.totalorder 0, 0
  // Predicated region
  $region22: #{gated_attention_fused.1} parent=0 // pred_check
    %p1820 = pneg %p1819
  $region23: #{gated_attention_fused.1} parent=0 // pred_check_branch
    %1822 = sbr.rel (%p1820) target = $region25
  $region24: #{gated_attention_fused.1} parent=0 // pred_region
    %v1823 = vlaneseq
    %v1824 = vshrl.u32 %v1823, 7
    %v1825 = vlaneseq
    %v1826 = vand.u32 %v1825, 127
    %v1827 = vadd.s32 %v1826, 128
    %v1828 = vadd.s32 %v1826, 256
    %v1829 = vadd.s32 %v1826, 384
    %v1830 = vmul.u32 %v1824, 512
    %v1831 = vadd.s32 %v1830, %v1826
    %v1832 = vadd.s32 %v1830, %v1827
    %v1833 = vadd.s32 %v1830, %v1828
    %v1834 = vadd.s32 %v1830, %v1829
    %vm1835 = vcmp.lt.s32.totalorder %v1831, 300
    %vm1836 = vcmp.lt.s32.totalorder %v1832, 300
    %vm1837 = vcmp.lt.s32.totalorder %v1833, 300
    %vm1838 = vcmp.lt.s32.totalorder %v1834, 300
    %v1839 = vld [vmem:[%s5] sm:$0xf]
    %v1841 = vlaneseq
    %v1842 = vshrl.u32 %v1841, 7
    %v1843 = vsub.s32 0, %v1842
    %v1844 = vrot.slane %v1839, %v1843
    %v1845 = vlaneseq
    %v1846 = vshrl.u32 %v1845, 7
    %v1847 = vsub.s32 1, %v1846
    %v1848 = vrot.slane %v1839, %v1847
    %v1849 = vlaneseq
    %v1850 = vshrl.u32 %v1849, 7
    %v1851 = vsub.s32 2, %v1850
    %v1852 = vrot.slane %v1839, %v1851
    %v1853 = vlaneseq
    %v1854 = vshrl.u32 %v1853, 7
    %v1855 = vsub.s32 3, %v1854
    %v1856 = vrot.slane %v1839, %v1855
    %v1861 = vsel %vm1835, %v1844, -inf
    %v1862 = vsel %vm1836, %v1848, -inf
    %v1863 = vsel %vm1837, %v1852, -inf
    %v1864 = vsel %vm1838, %v1856, -inf
    %vm1865 = vcmask 1040384
    %v1866 = vsel %vm1865, %v1861, -inf
    %v1867 = vsel %vm1865, %v1862, -inf
    %v1868 = vsel %vm1865, %v1863, -inf
    %v1869 = vsel %vm1865, %v1864, -inf
    %v1870 = vmax.f32 %v1866, %v1867
    %v1871 = vmax.f32 %v1868, %v1869
    %v1872 = vmax.f32 %v1870, %v1871
    %1873 = vmax.xlane.f32.xlu0 %v1872
    %v1874 = vpop.xlane.xlu0 %1873
    %v1875 = vsub.f32 %v1861, %v1874
    %v1876 = vsub.f32 %v1862, %v1874
    %v1877 = vsub.f32 %v1863, %v1874
    %v1878 = vsub.f32 %v1864, %v1874
    %v1879 = vmul.f32 %v1875, 1.442695
    %v1880 = vpow.pop %v1879
    %v1881 = vmul.f32 %v1876, 1.442695
    %v1882 = vpow.pop %v1881
    %v1883 = vmul.f32 %v1877, 1.442695
    %v1884 = vpow.pop %v1883
    %v1885 = vmul.f32 %v1878, 1.442695
    %v1886 = vpow.pop %v1885
    %v1887 = vsel %vm1865, %v1880, 0.0
    %v1888 = vsel %vm1865, %v1882, 0.0
    %v1889 = vadd.f32 %v1887, %v1888
    %v1890 = vsel %vm1865, %v1884, 0.0
    %v1891 = vadd.f32 %v1889, %v1890
    %v1892 = vsel %vm1865, %v1886, 0.0
    %v1893 = vadd.f32 %v1891, %v1892
    %1894 = vadd.xlane.f32.xlu0 %v1893
    %v1895 = vpop.xlane.xlu0 %1894
    %v1896 = vadd.f32 %v1895, 0.0
    %v1897 = vrcp.pop %v1896
    %v1898 = vmul.f32 %v1880, %v1897
    %v1899 = vmul.f32 %v1882, %v1897
    %v1900 = vmul.f32 %v1884, %v1897
    %v1901 = vmul.f32 %v1886, %v1897
    %v1906 = vcombine.low %v1898, %v1899
    %v1907 = vcombine.low %v1900, %v1901
    %v1909 = vunpack.c.l.s4 1966171168
    %v1910 = vunpack.c.0.s8 %v1909
    %v1911 = vlaneseq
    %v1912 = vshrl.u32 %v1911, 7
    %v1913 = vsub.s32 %v1910, %v1912
    %v1914 = vrot.slane %v1906, %v1913
    %v1916 = vunpack.c.l.s4 1966171168
    %v1917 = vunpack.c.0.s8 %v1916
    %v1918 = vlaneseq
    %v1919 = vshrl.u32 %v1918, 7
    %v1920 = vsub.s32 %v1917, %v1919
    %v1921 = vrot.slane %v1907, %v1920
    %v1922 = vcombine.low %v1914, %v1921
    %v1924 = vunpack.c.l.s4 1966171168
    %v1925 = vunpack.c.0.s8 %v1924
    %v1926 = vlaneseq
    %v1927 = vshrl.u32 %v1926, 7
    %v1928 = vsub.s32 %v1925, %v1927
    %v1929 = vrot.slane %v1922, %v1928
    %1931 = vst.msk [vmem:[%s5] sm:$0xf] %vm1817, %v1929
  $region25: #{gated_attention_fused.1} parent=0 // pred_fallthru
    _
  // Predicated region
  $region26: #{gated_attention_fused.1} parent=0 // pred_check
    _
  $region27: #{gated_attention_fused.1} parent=0 // pred_check_branch
    %1933 = sbr.rel (0) target = $region29
  $region28: #{gated_attention_fused.1} parent=0 // pred_region
    _
  $region29: #{gated_attention_fused.1} parent=0 // pred_fallthru
    _
  // Predicated region
  $region30: #{gated_attention_fused.1} parent=0 // pred_check
    _
  $region31: #{gated_attention_fused.1} parent=0 // pred_check_branch
    %1935 = sbr.rel (0) target = $region33
  $region32: #{gated_attention_fused.1} parent=0 // pred_region
    _
  $region33: #{gated_attention_fused.1} parent=0 // pred_fallthru
    _

</llo_original>
